<compile_context>
chip_gen: v5e
topology: v5e:2x2
jax: 0.10.0
libtpu: 0.0.40
codegen_flags: <defaults>
</compile_context>

<pallas_src>
import functools

import jax
import jax.numpy as jnp
from jax.experimental import pallas as pl
from jax.experimental.pallas import tpu as pltpu

ESP = 1e-8


def _sigmoid(x):
    # sigmoid(x) = 0.5 * (1 + tanh(x/2)): single EUP tanh, no exp/divide, no overflow.
    return 0.5 * jnp.tanh(0.5 * x) + 0.5


def _elu(x):
    return jnp.where(x > 0.0, x, jnp.exp(jnp.minimum(x, 0.0)) - 1.0)


def rnnprop_kernel(scalars_ref,                       # SMEM (8,): beta1,beta2,b1t,b2t,step_size,b_out,0,0
                   grad_ref, m_ref, v_ref,            # VMEM (1, TP) f32
                   state_ref,                         # VMEM (2*L*H, TP) state dtype (bf16)
                   small_ref,                         # VMEM (4H, 1) f32: rows [w_in0; w_in1; b_in; w_out]
                   w_ih_ref, w_hh_ref,                # VMEM (L, 4H, H) f32
                   b_lstm_ref,                        # VMEM (L, 4H, 1) f32 (= b_ih + b_hh)
                   step_ref, m_out_ref, v_out_ref,    # VMEM (1, TP) f32
                   state_out_ref,                     # VMEM (2*L*H, TP) state dtype (bf16)
                   *, act_dtype):
    f32 = jnp.float32
    beta1 = scalars_ref[0]
    beta2 = scalars_ref[1]
    b1t = scalars_ref[2] * beta1
    b2t = scalars_ref[3] * beta2
    step_size = scalars_ref[4]
    b_out = scalars_ref[5]

    grad = grad_ref[...]                                          # (1, TP)
    m_new = beta1 * m_ref[...] + (1.0 - beta1) * grad
    v_new = beta2 * v_ref[...] + (1.0 - beta2) * grad * grad

    inv_b1c = 1.0 / (1.0 - b1t)                                   # scalar unit
    inv_b2c = 1.0 / (1.0 - b2t)
    sv = jnp.sqrt(v_new * inv_b2c) + ESP
    inv_sv = pl.reciprocal(sv, approx=False)                      # one EUP recip + muls, no divides
    x0 = grad * inv_sv                                            # grad / sv
    x1 = (m_new * inv_b1c) * inv_sv                               # m-hat / sv

    H = w_ih_ref.shape[2]
    L = w_ih_ref.shape[0]
    LH = L * H

    w_in0 = small_ref[0 * H:1 * H, :]                             # sublane-aligned slices (free)
    w_in1 = small_ref[1 * H:2 * H, :]
    b_in = small_ref[2 * H:3 * H, :]
    w_out = small_ref[3 * H:4 * H, :]

    # linear_in (2 -> H) as two rank-1 broadcasts (H,1)x(1,TP), then ELU(alpha=1).
    x = _elu(w_in0 * x0 + w_in1 * x1 + b_in)                      # (H, TP) f32

    for layer in range(L):                                        # static unroll over layers
        h_prev = state_ref[layer * H:(layer + 1) * H, :].astype(f32)
        c_prev = state_ref[LH + layer * H:LH + (layer + 1) * H, :].astype(f32)
        # No concat: two small K=H MXU dots (MXU is far from the bottleneck).
        gates = (jnp.dot(w_ih_ref[layer], x, preferred_element_type=f32)
                 + jnp.dot(w_hh_ref[layer], h_prev, preferred_element_type=f32)
                 + b_lstm_ref[layer])                             # (4H, TP); gate order i,f,g,o
        g_act = gates.astype(act_dtype)                           # bf16 EUP on v6e/v7x, f32 on v5e
        i_g = _sigmoid(g_act[0 * H:1 * H, :])
        f_g = _sigmoid(g_act[1 * H:2 * H, :])
        g_g = jnp.tanh(g_act[2 * H:3 * H, :])
        o_g = _sigmoid(g_act[3 * H:4 * H, :])
        c_new = f_g.astype(f32) * c_prev + i_g.astype(f32) * g_g.astype(f32)   # f32 accumulation
        h_new = o_g.astype(f32) * jnp.tanh(c_new.astype(act_dtype)).astype(f32)
        state_out_ref[layer * H:(layer + 1) * H, :] = h_new.astype(state_out_ref.dtype)
        state_out_ref[LH + layer * H:LH + (layer + 1) * H, :] = c_new.astype(state_out_ref.dtype)
        x = h_new

    # linear_out (H -> 1): sublane (XLU) reduction, then tanh and step scaling.
    out = jnp.tanh(jnp.sum(x * w_out, axis=0, keepdims=True) + b_out)   # (1, TP)
    step_ref[...] = -out * step_size
    m_out_ref[...] = m_new
    v_out_ref[...] = v_new


def prepare_rnnprop_params(params):
    """One-time repacking of PyTorch-layout parameters into the kernel layout.
    Hoisted out of the per-step path (casts/reshapes happen once, not every step)."""
    f32 = jnp.float32
    w_in = params['w_in'].astype(f32)                  # (H, 2)
    H = w_in.shape[0]
    L = params['w_ih'].shape[0]
    small = jnp.concatenate([
        w_in[:, 0:1],                                  # w_in0
        w_in[:, 1:2],                                  # w_in1
        params['b_in'].astype(f32).reshape(H, 1),      # b_in
        params['w_out'].astype(f32).reshape(H, 1),     # w_out
    ], axis=0)                                         # (4H, 1): one operand, sublane-sliced in kernel
    return {
        'small': small,
        'w_ih': params['w_ih'].astype(f32),            # (L, 4H, H)
        'w_hh': params['w_hh'].astype(f32),            # (L, 4H, H)
        'b_lstm': (params['b_ih'] + params['b_hh']).astype(f32).reshape(L, 4 * H, 1),
        'b_out': params['b_out'].astype(f32).reshape(()),
    }


def pack_state(h0, c0, dtype=jnp.bfloat16):
    """(L, P, H) h/c -> lane-dense (2*L*H, P) slab, stored in `dtype` (bf16 halves the
    dominant HBM traffic; the kernel computes in f32)."""
    L, P, H = h0.shape
    h_t = jnp.transpose(h0, (0, 2, 1)).reshape(L * H, P)
    c_t = jnp.transpose(c0, (0, 2, 1)).reshape(L * H, P)
    return jnp.concatenate([h_t, c_t], axis=0).astype(dtype)


def unpack_state(slab, L, H):
    LH = L * H
    P = slab.shape[1]
    slab = slab.astype(jnp.float32)
    h = jnp.transpose(slab[:LH].reshape(L, H, P), (0, 2, 1))
    c = jnp.transpose(slab[LH:].reshape(L, H, P), (0, 2, 1))
    return h, c


def _pick_tile(P):
    """Lane-dense P tiles. Prefer tiles that (a) give >= 2 grid steps so
    dimension_semantics=("parallel",) actually splits across v7x's two TensorCores and
    (b) keep double-buffered in/out state blocks far under the scoped-VMEM default."""
    if P % 128 != 0:
        raise ValueError(
            f"P={P} must be a multiple of 128; pad the parameter vector upstream so "
            "every (1, TP) / (S, TP) store is lane-dense (unmasked).")
    for t in (2048, 1024, 512, 256, 128):
        if P % t == 0 and P // t >= 2:
            return t
    return P   # P == 128: single tile, nothing to split


def rnnprop_step(prepared, grad_row, m_row, v_row, b1t, b2t, state, *,
                 beta1, beta2, step_size, tile_p=None, act_dtype=jnp.float32):
    """One RNNprop optimizer step.

    grad_row/m_row/v_row: (1, P) float32; state: packed (2*L*H, P) slab (bf16 or f32).
    Returns (next_step_row, m_new, v_new, state_new). m/v/state are updated in place via
    input_output_aliases — wrap the call in jax.jit(..., donate_argnums=(2, 3, 6)) so the
    aliasing is honored end-to-end (no defensive HBM copies). Caller keeps the trivial
    scalar bookkeeping b1t *= beta1, b2t *= beta2 between steps.
    """
    f32 = jnp.float32
    P = grad_row.shape[1]
    S = state.shape[0]
    H = prepared['w_ih'].shape[2]
    L = prepared['w_ih'].shape[0]
    assert S == 2 * L * H

    TP = tile_p if tile_p is not None else _pick_tile(P)
    assert P % TP == 0 and TP % 128 == 0
    grid = (P // TP,)

    scalars = jnp.stack([
        jnp.asarray(beta1, f32), jnp.asarray(beta2, f32),
        jnp.asarray(b1t, f32), jnp.asarray(b2t, f32),
        jnp.asarray(step_size, f32), jnp.asarray(prepared['b_out'], f32),
        jnp.zeros((), f32), jnp.zeros((), f32)])

    col = lambda i: (0, i)         # tiles along P (lanes)
    const2 = lambda i: (0, 0)      # VMEM-resident weights (no re-DMA across iterations)
    const3 = lambda i: (0, 0, 0)
    smem = pl.BlockSpec(memory_space=pltpu.MemorySpace.SMEM)

    # Advisory cost estimate so XLA can schedule/overlap around the call.
    state_bytes = jnp.dtype(state.dtype).itemsize
    flops = int(P * (L * (4 * 4 * H * H + 10 * H) + 14 * H + 16))
    transcendentals = int(P * (L * 5 * H + H + 4))
    bytes_accessed = int(2 * S * P * state_bytes + 6 * 4 * P
                         + 4 * (2 * L * 4 * H * H + L * 4 * H + 4 * H))

    step_row, m_new, v_new, state_new = pl.pallas_call(
        functools.partial(rnnprop_kernel, act_dtype=act_dtype),
        out_shape=(
            jax.ShapeDtypeStruct((1, P), f32),            # next_step
            jax.ShapeDtypeStruct((1, P), f32),            # m_new
            jax.ShapeDtypeStruct((1, P), f32),            # v_new
            jax.ShapeDtypeStruct((S, P), state.dtype),    # state_new
        ),
        grid=grid,
        in_specs=[
            smem,                                      # scalars
            pl.BlockSpec((1, TP), col),                # grad
            pl.BlockSpec((1, TP), col),                # m
            pl.BlockSpec((1, TP), col),                # v
            pl.BlockSpec((S, TP), col),                # state slab
            pl.BlockSpec((4 * H, 1), const2),          # fused [w_in0; w_in1; b_in; w_out]
            pl.BlockSpec((L, 4 * H, H), const3),       # w_ih
            pl.BlockSpec((L, 4 * H, H), const3),       # w_hh
            pl.BlockSpec((L, 4 * H, 1), const3),       # b_lstm
        ],
        out_specs=(
            pl.BlockSpec((1, TP), col),
            pl.BlockSpec((1, TP), col),
            pl.BlockSpec((1, TP), col),
            pl.BlockSpec((S, TP), col),
        ),
        # Optimizer state overwritten in place every step: m->m_new, v->v_new, state->state_new.
        input_output_aliases={2: 1, 3: 2, 4: 3},
        compiler_params=pltpu.CompilerParams(
            # Shard P tiles across v7x's two TensorCores. No vmem_limit override:
            # the scoped default is ample and leaves the compiler scratch headroom
            # (64 MiB would be the whole physical VMEM on a v7x core).
            dimension_semantics=("parallel",)),
        cost_estimate=pl.CostEstimate(flops=flops, transcendentals=transcendentals,
                                      bytes_accessed=bytes_accessed),
    )(scalars, grad_row, m_row, v_row, state,
      prepared['small'], prepared['w_ih'], prepared['w_hh'], prepared['b_lstm'])

    return step_row, m_new, v_new, state_new


def rnnprop_reference(grad, m, v, b1t, b2t, h0, c0, params, *, beta1, beta2, step_size):
    """Pure-JAX f32 reference matching the PyTorch forward (natural layouts)."""
    m_new = beta1 * m + (1.0 - beta1) * grad
    v_new = beta2 * v + (1.0 - beta2) * grad ** 2
    b1t_new = b1t * beta1
    b2t_new = b2t * beta2
    sv = jnp.sqrt(v_new / (1.0 - b2t_new)) + ESP
    lstm_in = jnp.stack([grad / sv, m_new / (1.0 - b1t_new) / sv], axis=-1)      # (P, 2)
    pre = lstm_in @ params['w_in'].T + params['b_in']
    x = jnp.where(pre > 0.0, pre, jnp.exp(jnp.minimum(pre, 0.0)) - 1.0)
    L, P, H = h0.shape
    h_list, c_list = [], []
    for l in range(L):
        gates = (x @ params['w_ih'][l].T + params['b_ih'][l]
                 + h0[l] @ params['w_hh'][l].T + params['b_hh'][l])
        i = jax.nn.sigmoid(gates[:, :H])
        f = jax.nn.sigmoid(gates[:, H:2 * H])
        g = jnp.tanh(gates[:, 2 * H:3 * H])
        o = jax.nn.sigmoid(gates[:, 3 * H:])
        c_new = f * c0[l] + i * g
        h_new = o * jnp.tanh(c_new)
        h_list.append(h_new)
        c_list.append(c_new)
        x = h_new
    out = jnp.tanh(x @ params['w_out'].T + params['b_out']).reshape(grad.shape)
    return -out * step_size, m_new, v_new, jnp.stack(h_list), jnp.stack(c_list)


if __name__ == "__main__":
    # Small forward-consistent shapes: P parameters being optimized, hidden=32, 2 LSTM layers.
    # P=256 with TP=128 gives a 2-block grid so tiling / weight residency / aliasing /
    # megacore sharding are all exercised.
    P, H, L = 256, 32, 2
    beta1, beta2 = 0.95, 0.95
    step_size = 0.1

    key = jax.random.PRNGKey(0)
    keys = jax.random.split(key, 11)
    s = 1.0 / float(H) ** 0.5
    params = {
        'w_in': jax.random.normal(keys[0], (H, 2), jnp.float32) * s,         # linear_in.weight
        'b_in': jax.random.normal(keys[1], (H,), jnp.float32) * s,           # linear_in.bias
        'w_ih': jax.random.normal(keys[2], (L, 4 * H, H), jnp.float32) * s,  # lstm.weight_ih_l*
        'w_hh': jax.random.normal(keys[3], (L, 4 * H, H), jnp.float32) * s,  # lstm.weight_hh_l*
        'b_ih': jax.random.normal(keys[4], (L, 4 * H), jnp.float32) * s,
        'b_hh': jax.random.normal(keys[5], (L, 4 * H), jnp.float32) * s,
        'w_out': jax.random.normal(keys[6], (1, H), jnp.float32) * s,        # linear_out.weight
        'b_out': jax.random.normal(keys[7], (1,), jnp.float32) * s,          # linear_out.bias
    }
    grad = jax.random.normal(keys[8], (P,), jnp.float32)
    # reset_state(): scale * randn state, zero Adam moments, b1t = b2t = 1.
    h0 = 0.01 * jax.random.normal(keys[9], (L, P, H), jnp.float32)
    c0 = 0.01 * jax.random.normal(keys[10], (L, P, H), jnp.float32)
    m = jnp.zeros((P,), jnp.float32)
    v = jnp.zeros((P,), jnp.float32)
    b1t = 1.0
    b2t = 1.0

    # bf16 LSTM state in HBM everywhere; bf16 gate activations only where the EUP/VPU
    # have a bf16 path (v6e / v7x), f32 on v5e and older.
    state_dtype = jnp.bfloat16
    kind = jax.devices()[0].device_kind.lower()
    use_bf16_act = not any(t in kind for t in ("v2", "v3", "v4", "v5"))
    act_dtype = jnp.bfloat16 if use_bf16_act else jnp.float32

    # Reference sees the same bf16-rounded *initial* state the kernel reads, so the
    # comparison isolates kernel-internal (deliberate) precision tradeoffs.
    h0_q = h0.astype(state_dtype).astype(jnp.float32)
    c0_q = c0.astype(state_dtype).astype(jnp.float32)
    ref_step, ref_m, ref_v, ref_h, ref_c = rnnprop_reference(
        grad, m, v, b1t, b2t, h0_q, c0_q, params,
        beta1=beta1, beta2=beta2, step_size=step_size)

    prepared = prepare_rnnprop_params(params)            # hoisted one-time repack
    state = pack_state(h0, c0, dtype=state_dtype)        # one-time lane-dense bf16 packing

    # donate m_row (2), v_row (3), state (6) so input_output_aliases is honored
    # end-to-end (no defensive HBM copy of the state slab around the pallas_call).
    step_fn = jax.jit(
        functools.partial(rnnprop_step, beta1=beta1, beta2=beta2,
                          step_size=step_size, act_dtype=act_dtype),
        donate_argnums=(2, 3, 6))

    step_row, m_new, v_new, state_new = step_fn(
        prepared, grad.reshape(1, P), m.reshape(1, P), v.reshape(1, P),
        jnp.float32(b1t), jnp.float32(b2t), state)
    step_row, m_new, v_new, state_new = jax.block_until_ready(
        (step_row, m_new, v_new, state_new))

    h_new, c_new = unpack_state(state_new, L, H)
    # m/v stay exact f32; step and h/c tolerate the deliberate bf16 state / bf16-EUP rounding.
    checks = [
        ("step", step_row.reshape(P), ref_step, 1e-2, 5e-3),
        ("m",    m_new.reshape(P),    ref_m,    1e-5, 1e-6),
        ("v",    v_new.reshape(P),    ref_v,    1e-5, 1e-6),
        ("h",    h_new,               ref_h,    2e-2, 2e-2),
        ("c",    c_new,               ref_c,    2e-2, 2e-2),
    ]
    for name, got, want, rtol, atol in checks:
        err = float(jnp.max(jnp.abs(got - want)))
        assert jnp.allclose(got, want, rtol=rtol, atol=atol), f"{name}: max abs err {err}"

    print("KERNEL_OK")
</pallas_src>

<mosaic_0001>
module attributes {stable_mosaic.version = 11 : i64} {
  func.func @rnnprop_kernel(%arg0: i32, %arg1: memref<8xf32, #tpu.memory_space<smem>>, %arg2: memref<1x128xf32, #tpu.memory_space<vmem>>, %arg3: memref<1x128xf32, #tpu.memory_space<vmem>>, %arg4: memref<1x128xf32, #tpu.memory_space<vmem>>, %arg5: memref<128x128xbf16, #tpu.memory_space<vmem>>, %arg6: memref<128x1xf32, #tpu.memory_space<vmem>>, %arg7: memref<2x128x32xf32, #tpu.memory_space<vmem>>, %arg8: memref<2x128x32xf32, #tpu.memory_space<vmem>>, %arg9: memref<2x128x1xf32, #tpu.memory_space<vmem>>, %arg10: memref<1x128xf32, #tpu.memory_space<vmem>>, %arg11: memref<1x128xf32, #tpu.memory_space<vmem>>, %arg12: memref<1x128xf32, #tpu.memory_space<vmem>>, %arg13: memref<128x128xbf16, #tpu.memory_space<vmem>>) attributes {dimension_semantics = [#tpu.dimension_semantics<parallel>], iteration_bounds = array<i64: 2>, scalar_prefetch = 0 : i64, scratch_operands = 0 : i64, tpu.core_type = #tpu.core_type<tc>, window_params = [{transform_indices = @transform_0, window_bounds = array<i64: 8>}, {transform_indices = @transform_1, window_bounds = array<i64: 1, 128>}, {transform_indices = @transform_2, window_bounds = array<i64: 1, 128>}, {transform_indices = @transform_3, window_bounds = array<i64: 1, 128>}, {transform_indices = @transform_4, window_bounds = array<i64: 128, 128>}, {pipeline_mode = #tpu.pipeline_mode<synchronous>, transform_indices = @transform_5, window_bounds = array<i64: 128, 1>}, {pipeline_mode = #tpu.pipeline_mode<synchronous>, transform_indices = @transform_6, window_bounds = array<i64: 2, 128, 32>}, {pipeline_mode = #tpu.pipeline_mode<synchronous>, transform_indices = @transform_7, window_bounds = array<i64: 2, 128, 32>}, {pipeline_mode = #tpu.pipeline_mode<synchronous>, transform_indices = @transform_8, window_bounds = array<i64: 2, 128, 1>}, {transform_indices = @transform_9, window_bounds = array<i64: 1, 128>}, {transform_indices = @transform_10, window_bounds = array<i64: 1, 128>}, {transform_indices = @transform_11, window_bounds = array<i64: 1, 128>}, {transform_indices = @transform_12, window_bounds = array<i64: 128, 128>}]} {
    %c0 = arith.constant 0 : index
    %0 = memref.load %arg1[%c0] : memref<8xf32, #tpu.memory_space<smem>>
    %c1 = arith.constant 1 : index
    %1 = memref.load %arg1[%c1] : memref<8xf32, #tpu.memory_space<smem>>
    %c2 = arith.constant 2 : index
    %2 = memref.load %arg1[%c2] : memref<8xf32, #tpu.memory_space<smem>>
    %3 = arith.mulf %2, %0 : f32
    %c3 = arith.constant 3 : index
    %4 = memref.load %arg1[%c3] : memref<8xf32, #tpu.memory_space<smem>>
    %5 = arith.mulf %4, %1 : f32
    %c4 = arith.constant 4 : index
    %6 = memref.load %arg1[%c4] : memref<8xf32, #tpu.memory_space<smem>>
    %c5 = arith.constant 5 : index
    %7 = memref.load %arg1[%c5] : memref<8xf32, #tpu.memory_space<smem>>
    %c0_0 = arith.constant 0 : index
    %c0_1 = arith.constant 0 : index
    %8 = vector.load %arg2[%c0_0, %c0_1] : memref<1x128xf32, #tpu.memory_space<vmem>>, vector<1x128xf32>
    %c0_2 = arith.constant 0 : index
    %c0_3 = arith.constant 0 : index
    %9 = vector.load %arg3[%c0_2, %c0_3] : memref<1x128xf32, #tpu.memory_space<vmem>>, vector<1x128xf32>
    %10 = vector.broadcast %0 : f32 to vector<1x128xf32>
    %11 = arith.mulf %10, %9 : vector<1x128xf32>
    %cst = arith.constant 1.000000e+00 : f32
    %12 = arith.subf %cst, %0 : f32
    %13 = vector.broadcast %12 : f32 to vector<1x128xf32>
    %14 = arith.mulf %13, %8 : vector<1x128xf32>
    %15 = arith.addf %11, %14 : vector<1x128xf32>
    %c0_4 = arith.constant 0 : index
    %c0_5 = arith.constant 0 : index
    %16 = vector.load %arg4[%c0_4, %c0_5] : memref<1x128xf32, #tpu.memory_space<vmem>>, vector<1x128xf32>
    %17 = vector.broadcast %1 : f32 to vector<1x128xf32>
    %18 = arith.mulf %17, %16 : vector<1x128xf32>
    %cst_6 = arith.constant 1.000000e+00 : f32
    %19 = arith.subf %cst_6, %1 : f32
    %20 = vector.broadcast %19 : f32 to vector<1x128xf32>
    %21 = arith.mulf %20, %8 : vector<1x128xf32>
    %22 = arith.mulf %21, %8 : vector<1x128xf32>
    %23 = arith.addf %18, %22 : vector<1x128xf32>
    %cst_7 = arith.constant 1.000000e+00 : f32
    %24 = arith.subf %cst_7, %3 : f32
    %cst_8 = arith.constant 1.000000e+00 : f32
    %25 = arith.divf %cst_8, %24 : f32
    %cst_9 = arith.constant 1.000000e+00 : f32
    %26 = arith.subf %cst_9, %5 : f32
    %cst_10 = arith.constant 1.000000e+00 : f32
    %27 = arith.divf %cst_10, %26 : f32
    %28 = vector.broadcast %27 : f32 to vector<1x128xf32>
    %29 = arith.mulf %23, %28 : vector<1x128xf32>
    %30 = math.sqrt %29 : vector<1x128xf32>
    %cst_11 = arith.constant 9.99999993E-9 : f32
    %31 = vector.broadcast %cst_11 : f32 to vector<1x128xf32>
    %32 = arith.addf %30, %31 : vector<1x128xf32>
    %33 = tpu.reciprocal %32 : vector<1x128xf32> -> vector<1x128xf32>
    %34 = arith.mulf %8, %33 : vector<1x128xf32>
    %35 = vector.broadcast %25 : f32 to vector<1x128xf32>
    %36 = arith.mulf %15, %35 : vector<1x128xf32>
    %37 = arith.mulf %36, %33 : vector<1x128xf32>
    %c0_12 = arith.constant 0 : index
    %c0_13 = arith.constant 0 : index
    %38 = vector.load %arg6[%c0_12, %c0_13] : memref<128x1xf32, #tpu.memory_space<vmem>>, vector<32x1xf32>
    %c32 = arith.constant 32 : index
    %c0_14 = arith.constant 0 : index
    %39 = vector.load %arg6[%c32, %c0_14] : memref<128x1xf32, #tpu.memory_space<vmem>>, vector<32x1xf32>
    %c64 = arith.constant 64 : index
    %c0_15 = arith.constant 0 : index
    %40 = vector.load %arg6[%c64, %c0_15] : memref<128x1xf32, #tpu.memory_space<vmem>>, vector<32x1xf32>
    %c96 = arith.constant 96 : index
    %c0_16 = arith.constant 0 : index
    %41 = vector.load %arg6[%c96, %c0_16] : memref<128x1xf32, #tpu.memory_space<vmem>>, vector<32x1xf32>
    %42 = vector.broadcast %38 : vector<32x1xf32> to vector<32x128xf32>
    %43 = vector.broadcast %34 : vector<1x128xf32> to vector<32x128xf32>
    %44 = arith.mulf %42, %43 : vector<32x128xf32>
    %45 = vector.broadcast %39 : vector<32x1xf32> to vector<32x128xf32>
    %46 = vector.broadcast %37 : vector<1x128xf32> to vector<32x128xf32>
    %47 = arith.mulf %45, %46 : vector<32x128xf32>
    %48 = arith.addf %44, %47 : vector<32x128xf32>
    %49 = vector.broadcast %40 : vector<32x1xf32> to vector<32x128xf32>
    %50 = arith.addf %48, %49 : vector<32x128xf32>
    %cst_17 = arith.constant 0.000000e+00 : f32
    %51 = vector.broadcast %cst_17 : f32 to vector<32x128xf32>
    %52 = arith.cmpf ogt, %50, %51 : vector<32x128xf32>
    %cst_18 = arith.constant 0.000000e+00 : f32
    %53 = vector.broadcast %cst_18 : f32 to vector<32x128xf32>
    %54 = arith.minimumf %50, %53 : vector<32x128xf32>
    %55 = math.exp %54 : vector<32x128xf32>
    %cst_19 = arith.constant 1.000000e+00 : f32
    %56 = vector.broadcast %cst_19 : f32 to vector<32x128xf32>
    %57 = arith.subf %55, %56 : vector<32x128xf32>
    %58 = arith.select %52, %50, %57 : vector<32x128xi1>, vector<32x128xf32>
    %c0_20 = arith.constant 0 : index
    %c0_21 = arith.constant 0 : index
    %59 = vector.load %arg5[%c0_20, %c0_21] : memref<128x128xbf16, #tpu.memory_space<vmem>>, vector<32x128xbf16>
    %60 = arith.extf %59 : vector<32x128xbf16> to vector<32x128xf32>
    %c64_22 = arith.constant 64 : index
    %c0_23 = arith.constant 0 : index
    %61 = vector.load %arg5[%c64_22, %c0_23] : memref<128x128xbf16, #tpu.memory_space<vmem>>, vector<32x128xbf16>
    %62 = arith.extf %61 : vector<32x128xbf16> to vector<32x128xf32>
    %c0_24 = arith.constant 0 : index
    %c0_25 = arith.constant 0 : index
    %c0_26 = arith.constant 0 : index
    %63 = vector.load %arg7[%c0_24, %c0_25, %c0_26] : memref<2x128x32xf32, #tpu.memory_space<vmem>>, vector<1x128x32xf32>
    %64 = vector.shape_cast %63 : vector<1x128x32xf32> to vector<128x32xf32>
    %cst_27 = arith.constant dense<0.000000e+00> : vector<128x128xf32>
    %65 = tpu.matmul %64, %58, %cst_27 {dimension_numbers = #tpu.dot_dimension_numbers<[1], [0], [0], [1], [0, 0, 1, 1], [], []>} : vector<128x32xf32>, vector<32x128xf32>, vector<128x128xf32> -> vector<128x128xf32>
    %c0_28 = arith.constant 0 : index
    %c0_29 = arith.constant 0 : index
    %c0_30 = arith.constant 0 : index
    %66 = vector.load %arg8[%c0_28, %c0_29, %c0_30] : memref<2x128x32xf32, #tpu.memory_space<vmem>>, vector<1x128x32xf32>
    %67 = vector.shape_cast %66 : vector<1x128x32xf32> to vector<128x32xf32>
    %cst_31 = arith.constant dense<0.000000e+00> : vector<128x128xf32>
    %68 = tpu.matmul %67, %60, %cst_31 {dimension_numbers = #tpu.dot_dimension_numbers<[1], [0], [0], [1], [0, 0, 1, 1], [], []>} : vector<128x32xf32>, vector<32x128xf32>, vector<128x128xf32> -> vector<128x128xf32>
    %69 = arith.addf %65, %68 : vector<128x128xf32>
    %c0_32 = arith.constant 0 : index
    %c0_33 = arith.constant 0 : index
    %c0_34 = arith.constant 0 : index
    %70 = vector.load %arg9[%c0_32, %c0_33, %c0_34] : memref<2x128x1xf32, #tpu.memory_space<vmem>>, vector<1x128x1xf32>
    %71 = vector.shape_cast %70 : vector<1x128x1xf32> to vector<128x1xf32>
    %72 = vector.broadcast %71 : vector<128x1xf32> to vector<128x128xf32>
    %73 = arith.addf %69, %72 : vector<128x128xf32>
    %74 = arith.truncf %73 : vector<128x128xf32> to vector<128x128xbf16>
    %75 = vector.extract_strided_slice %74 {offsets = [0, 0], sizes = [32, 128], strides = [1, 1]} : vector<128x128xbf16> to vector<32x128xbf16>
    %cst_35 = arith.constant 5.000000e-01 : bf16
    %76 = vector.broadcast %cst_35 : bf16 to vector<32x128xbf16>
    %77 = arith.mulf %76, %75 : vector<32x128xbf16>
    %78 = math.tanh %77 : vector<32x128xbf16>
    %cst_36 = arith.constant 5.000000e-01 : bf16
    %79 = vector.broadcast %cst_36 : bf16 to vector<32x128xbf16>
    %80 = arith.mulf %79, %78 : vector<32x128xbf16>
    %cst_37 = arith.constant 5.000000e-01 : bf16
    %81 = vector.broadcast %cst_37 : bf16 to vector<32x128xbf16>
    %82 = arith.addf %80, %81 : vector<32x128xbf16>
    %83 = vector.extract_strided_slice %74 {offsets = [32, 0], sizes = [32, 128], strides = [1, 1]} : vector<128x128xbf16> to vector<32x128xbf16>
    %cst_38 = arith.constant 5.000000e-01 : bf16
    %84 = vector.broadcast %cst_38 : bf16 to vector<32x128xbf16>
    %85 = arith.mulf %84, %83 : vector<32x128xbf16>
    %86 = math.tanh %85 : vector<32x128xbf16>
    %cst_39 = arith.constant 5.000000e-01 : bf16
    %87 = vector.broadcast %cst_39 : bf16 to vector<32x128xbf16>
    %88 = arith.mulf %87, %86 : vector<32x128xbf16>
    %cst_40 = arith.constant 5.000000e-01 : bf16
    %89 = vector.broadcast %cst_40 : bf16 to vector<32x128xbf16>
    %90 = arith.addf %88, %89 : vector<32x128xbf16>
    %91 = vector.extract_strided_slice %74 {offsets = [64, 0], sizes = [32, 128], strides = [1, 1]} : vector<128x128xbf16> to vector<32x128xbf16>
    %92 = math.tanh %91 : vector<32x128xbf16>
    %93 = vector.extract_strided_slice %74 {offsets = [96, 0], sizes = [32, 128], strides = [1, 1]} : vector<128x128xbf16> to vector<32x128xbf16>
    %cst_41 = arith.constant 5.000000e-01 : bf16
    %94 = vector.broadcast %cst_41 : bf16 to vector<32x128xbf16>
    %95 = arith.mulf %94, %93 : vector<32x128xbf16>
    %96 = math.tanh %95 : vector<32x128xbf16>
    %cst_42 = arith.constant 5.000000e-01 : bf16
    %97 = vector.broadcast %cst_42 : bf16 to vector<32x128xbf16>
    %98 = arith.mulf %97, %96 : vector<32x128xbf16>
    %cst_43 = arith.constant 5.000000e-01 : bf16
    %99 = vector.broadcast %cst_43 : bf16 to vector<32x128xbf16>
    %100 = arith.addf %98, %99 : vector<32x128xbf16>
    %101 = arith.extf %90 : vector<32x128xbf16> to vector<32x128xf32>
    %102 = arith.mulf %101, %62 : vector<32x128xf32>
    %103 = arith.extf %82 : vector<32x128xbf16> to vector<32x128xf32>
    %104 = arith.extf %92 : vector<32x128xbf16> to vector<32x128xf32>
    %105 = arith.mulf %103, %104 : vector<32x128xf32>
    %106 = arith.addf %102, %105 : vector<32x128xf32>
    %107 = arith.extf %100 : vector<32x128xbf16> to vector<32x128xf32>
    %108 = arith.truncf %106 : vector<32x128xf32> to vector<32x128xbf16>
    %109 = math.tanh %108 : vector<32x128xbf16>
    %110 = arith.extf %109 : vector<32x128xbf16> to vector<32x128xf32>
    %111 = arith.mulf %107, %110 : vector<32x128xf32>
    %112 = arith.truncf %111 : vector<32x128xf32> to vector<32x128xbf16>
    %c0_44 = arith.constant 0 : index
    %c0_45 = arith.constant 0 : index
    %113 = vector.load %arg13[%c0_44, %c0_45] : memref<128x128xbf16, #tpu.memory_space<vmem>>, vector<32x128xbf16>
    tpu.vector_store %arg13[%c0_44, %c0_45], %112 {strides = array<i32>} : memref<128x128xbf16, #tpu.memory_space<vmem>>, vector<32x128xbf16>,
    %114 = arith.truncf %106 : vector<32x128xf32> to vector<32x128xbf16>
    %c64_46 = arith.constant 64 : index
    %c0_47 = arith.constant 0 : index
    %115 = vector.load %arg13[%c64_46, %c0_47] : memref<128x128xbf16, #tpu.memory_space<vmem>>, vector<32x128xbf16>
    tpu.vector_store %arg13[%c64_46, %c0_47], %114 {strides = array<i32>} : memref<128x128xbf16, #tpu.memory_space<vmem>>, vector<32x128xbf16>,
    %c32_48 = arith.constant 32 : index
    %c0_49 = arith.constant 0 : index
    %116 = vector.load %arg5[%c32_48, %c0_49] : memref<128x128xbf16, #tpu.memory_space<vmem>>, vector<32x128xbf16>
    %117 = arith.extf %116 : vector<32x128xbf16> to vector<32x128xf32>
    %c96_50 = arith.constant 96 : index
    %c0_51 = arith.constant 0 : index
    %118 = vector.load %arg5[%c96_50, %c0_51] : memref<128x128xbf16, #tpu.memory_space<vmem>>, vector<32x128xbf16>
    %119 = arith.extf %118 : vector<32x128xbf16> to vector<32x128xf32>
    %c1_52 = arith.constant 1 : index
    %c0_53 = arith.constant 0 : index
    %c0_54 = arith.constant 0 : index
    %120 = vector.load %arg7[%c1_52, %c0_53, %c0_54] : memref<2x128x32xf32, #tpu.memory_space<vmem>>, vector<1x128x32xf32>
    %121 = vector.shape_cast %120 : vector<1x128x32xf32> to vector<128x32xf32>
    %cst_55 = arith.constant dense<0.000000e+00> : vector<128x128xf32>
    %122 = tpu.matmul %121, %111, %cst_55 {dimension_numbers = #tpu.dot_dimension_numbers<[1], [0], [0], [1], [0, 0, 1, 1], [], []>} : vector<128x32xf32>, vector<32x128xf32>, vector<128x128xf32> -> vector<128x128xf32>
    %c1_56 = arith.constant 1 : index
    %c0_57 = arith.constant 0 : index
    %c0_58 = arith.constant 0 : index
    %123 = vector.load %arg8[%c1_56, %c0_57, %c0_58] : memref<2x128x32xf32, #tpu.memory_space<vmem>>, vector<1x128x32xf32>
    %124 = vector.shape_cast %123 : vector<1x128x32xf32> to vector<128x32xf32>
    %cst_59 = arith.constant dense<0.000000e+00> : vector<128x128xf32>
    %125 = tpu.matmul %124, %117, %cst_59 {dimension_numbers = #tpu.dot_dimension_numbers<[1], [0], [0], [1], [0, 0, 1, 1], [], []>} : vector<128x32xf32>, vector<32x128xf32>, vector<128x128xf32> -> vector<128x128xf32>
    %126 = arith.addf %122, %125 : vector<128x128xf32>
    %c1_60 = arith.constant 1 : index
    %c0_61 = arith.constant 0 : index
    %c0_62 = arith.constant 0 : index
    %127 = vector.load %arg9[%c1_60, %c0_61, %c0_62] : memref<2x128x1xf32, #tpu.memory_space<vmem>>, vector<1x128x1xf32>
    %128 = vector.shape_cast %127 : vector<1x128x1xf32> to vector<128x1xf32>
    %129 = vector.broadcast %128 : vector<128x1xf32> to vector<128x128xf32>
    %130 = arith.addf %126, %129 : vector<128x128xf32>
    %131 = arith.truncf %130 : vector<128x128xf32> to vector<128x128xbf16>
    %132 = vector.extract_strided_slice %131 {offsets = [0, 0], sizes = [32, 128], strides = [1, 1]} : vector<128x128xbf16> to vector<32x128xbf16>
    %cst_63 = arith.constant 5.000000e-01 : bf16
    %133 = vector.broadcast %cst_63 : bf16 to vector<32x128xbf16>
    %134 = arith.mulf %133, %132 : vector<32x128xbf16>
    %135 = math.tanh %134 : vector<32x128xbf16>
    %cst_64 = arith.constant 5.000000e-01 : bf16
    %136 = vector.broadcast %cst_64 : bf16 to vector<32x128xbf16>
    %137 = arith.mulf %136, %135 : vector<32x128xbf16>
    %cst_65 = arith.constant 5.000000e-01 : bf16
    %138 = vector.broadcast %cst_65 : bf16 to vector<32x128xbf16>
    %139 = arith.addf %137, %138 : vector<32x128xbf16>
    %140 = vector.extract_strided_slice %131 {offsets = [32, 0], sizes = [32, 128], strides = [1, 1]} : vector<128x128xbf16> to vector<32x128xbf16>
    %cst_66 = arith.constant 5.000000e-01 : bf16
    %141 = vector.broadcast %cst_66 : bf16 to vector<32x128xbf16>
    %142 = arith.mulf %141, %140 : vector<32x128xbf16>
    %143 = math.tanh %142 : vector<32x128xbf16>
    %cst_67 = arith.constant 5.000000e-01 : bf16
    %144 = vector.broadcast %cst_67 : bf16 to vector<32x128xbf16>
    %145 = arith.mulf %144, %143 : vector<32x128xbf16>
    %cst_68 = arith.constant 5.000000e-01 : bf16
    %146 = vector.broadcast %cst_68 : bf16 to vector<32x128xbf16>
    %147 = arith.addf %145, %146 : vector<32x128xbf16>
    %148 = vector.extract_strided_slice %131 {offsets = [64, 0], sizes = [32, 128], strides = [1, 1]} : vector<128x128xbf16> to vector<32x128xbf16>
    %149 = math.tanh %148 : vector<32x128xbf16>
    %150 = vector.extract_strided_slice %131 {offsets = [96, 0], sizes = [32, 128], strides = [1, 1]} : vector<128x128xbf16> to vector<32x128xbf16>
    %cst_69 = arith.constant 5.000000e-01 : bf16
    %151 = vector.broadcast %cst_69 : bf16 to vector<32x128xbf16>
    %152 = arith.mulf %151, %150 : vector<32x128xbf16>
    %153 = math.tanh %152 : vector<32x128xbf16>
    %cst_70 = arith.constant 5.000000e-01 : bf16
    %154 = vector.broadcast %cst_70 : bf16 to vector<32x128xbf16>
    %155 = arith.mulf %154, %153 : vector<32x128xbf16>
    %cst_71 = arith.constant 5.000000e-01 : bf16
    %156 = vector.broadcast %cst_71 : bf16 to vector<32x128xbf16>
    %157 = arith.addf %155, %156 : vector<32x128xbf16>
    %158 = arith.extf %147 : vector<32x128xbf16> to vector<32x128xf32>
    %159 = arith.mulf %158, %119 : vector<32x128xf32>
    %160 = arith.extf %139 : vector<32x128xbf16> to vector<32x128xf32>
    %161 = arith.extf %149 : vector<32x128xbf16> to vector<32x128xf32>
    %162 = arith.mulf %160, %161 : vector<32x128xf32>
    %163 = arith.addf %159, %162 : vector<32x128xf32>
    %164 = arith.extf %157 : vector<32x128xbf16> to vector<32x128xf32>
    %165 = arith.truncf %163 : vector<32x128xf32> to vector<32x128xbf16>
    %166 = math.tanh %165 : vector<32x128xbf16>
    %167 = arith.extf %166 : vector<32x128xbf16> to vector<32x128xf32>
    %168 = arith.mulf %164, %167 : vector<32x128xf32>
    %169 = arith.truncf %168 : vector<32x128xf32> to vector<32x128xbf16>
    %c32_72 = arith.constant 32 : index
    %c0_73 = arith.constant 0 : index
    %170 = vector.load %arg13[%c32_72, %c0_73] : memref<128x128xbf16, #tpu.memory_space<vmem>>, vector<32x128xbf16>
    tpu.vector_store %arg13[%c32_72, %c0_73], %169 {strides = array<i32>} : memref<128x128xbf16, #tpu.memory_space<vmem>>, vector<32x128xbf16>,
    %171 = arith.truncf %163 : vector<32x128xf32> to vector<32x128xbf16>
    %c96_74 = arith.constant 96 : index
    %c0_75 = arith.constant 0 : index
    %172 = vector.load %arg13[%c96_74, %c0_75] : memref<128x128xbf16, #tpu.memory_space<vmem>>, vector<32x128xbf16>
    tpu.vector_store %arg13[%c96_74, %c0_75], %171 {strides = array<i32>} : memref<128x128xbf16, #tpu.memory_space<vmem>>, vector<32x128xbf16>,
    %173 = vector.broadcast %41 : vector<32x1xf32> to vector<32x128xf32>
    %174 = arith.mulf %168, %173 : vector<32x128xf32>
    %cst_76 = arith.constant dense<0.000000e+00> : vector<128xf32>
    %175 = vector.multi_reduction <add>, %174, %cst_76 [0] : vector<32x128xf32> to vector<128xf32>
    %176 = vector.shape_cast %175 : vector<128xf32> to vector<1x128xf32>
    %177 = vector.broadcast %7 : f32 to vector<1x128xf32>
    %178 = arith.addf %176, %177 : vector<1x128xf32>
    %179 = math.tanh %178 : vector<1x128xf32>
    %cst_77 = arith.constant 0.000000e+00 : f32
    %180 = vector.broadcast %cst_77 : f32 to vector<1x128xf32>
    %181 = arith.subf %180, %179 : vector<1x128xf32>
    %182 = vector.broadcast %6 : f32 to vector<1x128xf32>
    %183 = arith.mulf %181, %182 : vector<1x128xf32>
    %c0_78 = arith.constant 0 : index
    %c0_79 = arith.constant 0 : index
    %184 = vector.load %arg10[%c0_78, %c0_79] : memref<1x128xf32, #tpu.memory_space<vmem>>, vector<1x128xf32>
    tpu.vector_store %arg10[%c0_78, %c0_79], %183 {strides = array<i32>} : memref<1x128xf32, #tpu.memory_space<vmem>>, vector<1x128xf32>,
    %c0_80 = arith.constant 0 : index
    %c0_81 = arith.constant 0 : index
    %185 = vector.load %arg11[%c0_80, %c0_81] : memref<1x128xf32, #tpu.memory_space<vmem>>, vector<1x128xf32>
    tpu.vector_store %arg11[%c0_80, %c0_81], %15 {strides = array<i32>} : memref<1x128xf32, #tpu.memory_space<vmem>>, vector<1x128xf32>,
    %c0_82 = arith.constant 0 : index
    %c0_83 = arith.constant 0 : index
    %186 = vector.load %arg12[%c0_82, %c0_83] : memref<1x128xf32, #tpu.memory_space<vmem>>, vector<1x128xf32>
    tpu.vector_store %arg12[%c0_82, %c0_83], %23 {strides = array<i32>} : memref<1x128xf32, #tpu.memory_space<vmem>>, vector<1x128xf32>,
    return
  }
  func.func @transform_0(%arg0: i32) -> i32 {
    %c0_i32 = arith.constant 0 : i32
    %c0_i32_0 = arith.constant 0 : i32
    return %c0_i32 : i32
  }
  func.func @transform_1(%arg0: i32) -> (i32, i32) {
    %c0_i32 = arith.constant 0 : i32
    %c0_i32_0 = arith.constant 0 : i32
    return %c0_i32, %arg0 : i32, i32
  }
  func.func @transform_2(%arg0: i32) -> (i32, i32) {
    %c0_i32 = arith.constant 0 : i32
    %c0_i32_0 = arith.constant 0 : i32
    return %c0_i32, %arg0 : i32, i32
  }
  func.func @transform_3(%arg0: i32) -> (i32, i32) {
    %c0_i32 = arith.constant 0 : i32
    %c0_i32_0 = arith.constant 0 : i32
    return %c0_i32, %arg0 : i32, i32
  }
  func.func @transform_4(%arg0: i32) -> (i32, i32) {
    %c0_i32 = arith.constant 0 : i32
    %c0_i32_0 = arith.constant 0 : i32
    return %c0_i32, %arg0 : i32, i32
  }
  func.func @transform_5(%arg0: i32) -> (i32, i32) {
    %c0_i32 = arith.constant 0 : i32
    %c0_i32_0 = arith.constant 0 : i32
    %c0_i32_1 = arith.constant 0 : i32
    return %c0_i32, %c0_i32_0 : i32, i32
  }
  func.func @transform_6(%arg0: i32) -> (i32, i32, i32) {
    %c0_i32 = arith.constant 0 : i32
    %c0_i32_0 = arith.constant 0 : i32
    %c0_i32_1 = arith.constant 0 : i32
    %c0_i32_2 = arith.constant 0 : i32
    return %c0_i32, %c0_i32_0, %c0_i32_1 : i32, i32, i32
  }
  func.func @transform_7(%arg0: i32) -> (i32, i32, i32) {
    %c0_i32 = arith.constant 0 : i32
    %c0_i32_0 = arith.constant 0 : i32
    %c0_i32_1 = arith.constant 0 : i32
    %c0_i32_2 = arith.constant 0 : i32
    return %c0_i32, %c0_i32_0, %c0_i32_1 : i32, i32, i32
  }
  func.func @transform_8(%arg0: i32) -> (i32, i32, i32) {
    %c0_i32 = arith.constant 0 : i32
    %c0_i32_0 = arith.constant 0 : i32
    %c0_i32_1 = arith.constant 0 : i32
    %c0_i32_2 = arith.constant 0 : i32
    return %c0_i32, %c0_i32_0, %c0_i32_1 : i32, i32, i32
  }
  func.func @transform_9(%arg0: i32) -> (i32, i32) {
    %c0_i32 = arith.constant 0 : i32
    %c0_i32_0 = arith.constant 0 : i32
    return %c0_i32, %arg0 : i32, i32
  }
  func.func @transform_10(%arg0: i32) -> (i32, i32) {
    %c0_i32 = arith.constant 0 : i32
    %c0_i32_0 = arith.constant 0 : i32
    return %c0_i32, %arg0 : i32, i32
  }
  func.func @transform_11(%arg0: i32) -> (i32, i32) {
    %c0_i32 = arith.constant 0 : i32
    %c0_i32_0 = arith.constant 0 : i32
    return %c0_i32, %arg0 : i32, i32
  }
  func.func @transform_12(%arg0: i32) -> (i32, i32) {
    %c0_i32 = arith.constant 0 : i32
    %c0_i32_0 = arith.constant 0 : i32
    return %c0_i32, %arg0 : i32, i32
  }
}

</mosaic_0001>

<llo_original>
// kernel: rnnprop_step.1
$region0: #{rnnprop_step.1}
  #allocation0 [shape = 'u32[]', space=smem, size = 0x4, offset = 0x4, fixed_abs, tag = 'smem constant byte address 0x4 - core index']
  #allocation1 [shape = 'u32[72,128]{1,0:T(1,128)}', space=vmem, size = 0x9000, scoped, tag = 'internal scratch']
  %s0 = inlined_call_operand.vmem [shape: f32[8], index: 0, kind: input, shape index: {}]
  %s1 = inlined_call_operand.vmem [shape: f32[1,256], index: 1, kind: input, shape index: {}]
  %s2 = inlined_call_operand.vmem [shape: f32[1,256], index: 2, kind: input, shape index: {}, may-alias: {2,10}]
  %s3 = inlined_call_operand.vmem [shape: f32[1,256], index: 3, kind: input, shape index: {}, may-alias: {3,11}]
  %s4 = inlined_call_operand.vmem [shape: bf16[128,256], index: 4, kind: input, shape index: {}, may-alias: {4,12}]
  %s5 = inlined_call_operand.vmem [shape: f32[128,1], index: 5, kind: input, shape index: {}]
  %s6 = inlined_call_operand.vmem [shape: f32[2,128,32], index: 6, kind: input, shape index: {}]
  %s7 = inlined_call_operand.vmem [shape: f32[2,128,32], index: 7, kind: input, shape index: {}]
  %s8 = inlined_call_operand.vmem [shape: f32[2,128,1], index: 8, kind: input, shape index: {}]
  %s9 = inlined_call_operand.vmem [shape: f32[1,256], index: 9, kind: output, shape index: {0}]
  %s10 = inlined_call_operand.vmem [shape: f32[1,256], index: 10, kind: output, shape index: {1}, may-alias: {2,10}]
  %s11 = inlined_call_operand.vmem [shape: f32[1,256], index: 11, kind: output, shape index: {2}, may-alias: {3,11}]
  %s12 = inlined_call_operand.vmem [shape: bf16[128,256], index: 12, kind: output, shape index: {3}, may-alias: {4,12}]
  %13 = xla_tuple %s9, %s10, %s11, %s12
  %s14 = sld [smem:[#allocation0]]
  $region175: #{rnnprop_step.1} parent=0
    _
  %s16 = ssub.s32 1, %s14
  %s17 = scalar_select 0, %s16, %s14
  $region1: #{rnnprop_step.1} parent=0
    #allocation2 [shape = 'u8[512]{0}', space=smem, size = 0x200, scoped, tag = 'input window, operand 0, single buffered']
    #allocation3 [shape = 's32[2]{0}', space=sflag, size = 0x8, scoped, tag = 'scoped memory for rnnprop_step.1']
    #allocation4 [shape = 'u8[65536]{0}', space=vmem, size = 0x10000, scoped, tag = 'input window, operand 4']
    #allocation5 [shape = 'u8[65536]{0}', space=vmem, size = 0x10000, scoped, tag = 'output window, operand 3']
    %18 = vsyncpa [#allocation3], 0
    loop: start=0, step=1, limit=4
    $region2: #{rnnprop_step.1} parent=1 // loop_pre_header
      _
    $region3: #{rnnprop_step.1} parent=1 // loop_header
      %s20 = sphi 0, %s24
      %p21 = scmp.ge.s32.totalorder %s20, 4
      %s28 = sphi 0, %s28
      %s30 = sphi 0, %s28
      %s31 = sphi 0, %s30
      %s45 = sphi 0, %s31
      %s51 = sphi 0, %s53
      %s54 = sphi 0, %s51
      %s55 = sphi 0, %s54
      %s71 = sphi 0, %s55
      %s77 = sphi 0, %s79
      %s80 = sphi 0, %s77
      %s81 = sphi 0, %s80
      %s97 = sphi 0, %s81
      %s103 = sphi 0, %s105
      %s106 = sphi 0, %s103
      %s107 = sphi 0, %s106
      %s123 = sphi 0, %s107
      %s129 = sphi 0, %s131
      %s132 = sphi 0, %s129
      %s133 = sphi 0, %s132
      %s149 = sphi 0, %s133
      %s153 = sphi 0, %s153
      %s155 = sphi 0, %s153
      %s156 = sphi 0, %s155
      %s170 = sphi 0, %s156
      %s174 = sphi 0, %s174
      %s176 = sphi 0, %s174
      %s177 = sphi 0, %s176
      %s191 = sphi 0, %s177
      %s195 = sphi 0, %s195
      %s197 = sphi 0, %s195
      %s198 = sphi 0, %s197
      %s212 = sphi 0, %s198
      %s216 = sphi 0, %s216
      %s218 = sphi 0, %s216
      %s219 = sphi 0, %s218
      %s233 = sphi 0, %s219
      %s239 = sphi 0, %s241
      %s242 = sphi 0, %s239
      %s243 = sphi 0, %s242
      %s259 = sphi 0, %s243
      %s265 = sphi 0, %s267
      %s268 = sphi 0, %s265
      %s269 = sphi 0, %s268
      %s285 = sphi 0, %s269
      %s291 = sphi 0, %s293
      %s294 = sphi 0, %s291
      %s295 = sphi 0, %s294
      %s311 = sphi 0, %s295
      %s317 = sphi 0, %s319
      %s320 = sphi 0, %s317
      %s321 = sphi 0, %s320
      %s337 = sphi 0, %s321
    $region4: #{rnnprop_step.1} parent=1 // loop_header_branch
      %23 = sbr.rel (%p21) target = $region8
    $region5: #{rnnprop_step.1} parent=1 // loop_body
      %s25 = ssub.s32 %s20, 1
      %s26 = ssub.s32 %s20, 2
      %s27 = sadd.s32 %s20, 1
      %s29 = sadd.s32 %s28, 1
      %p32 = scmp.eq.s32.totalorder %s20, 1
      %p33 = scmp.ne.s32.totalorder %s28, %s30
      %p34 = scmp.eq.s32.totalorder %s20, 0
      %p35 = por %p33, %p34
      %p36 = scmp.ne.s32.totalorder %s28, %s30
      %p37 = scmp.eq.s32.totalorder %s25, 1
      %p38 = por %p36, %p37
      %p39 = scmp.ne.s32.totalorder %s30, %s31
      %p40 = scmp.eq.s32.totalorder %s25, 0
      %p41 = por %p39, %p40
      %p42 = scmp.ne.s32.totalorder %s30, %s31
      %p43 = scmp.eq.s32.totalorder %s26, 1
      %p44 = por %p42, %p43
      %p46 = scmp.ne.s32.totalorder %s31, %s45
      %p47 = scmp.eq.s32.totalorder %s26, 0
      %p48 = por %p46, %p47
      %s49 = ssub.s32 %s20, %s27
      %p50 = scmp.eq.s32.totalorder %s49, 0
      %s52 = sadd.s32 %s51, 1
      %s53 = scalar_select %p50, %s51, %s52
      %p56 = pneg %p50
      %p57 = scmp.eq.s32.totalorder %s20, 1
      %p58 = por %p56, %p57
      %p59 = scmp.ne.s32.totalorder %s51, %s54
      %p60 = scmp.eq.s32.totalorder %s20, 0
      %p61 = por %p59, %p60
      %p62 = scmp.ne.s32.totalorder %s51, %s54
      %p63 = scmp.eq.s32.totalorder %s25, 1
      %p64 = por %p62, %p63
      %p65 = scmp.ne.s32.totalorder %s54, %s55
      %p66 = scmp.eq.s32.totalorder %s25, 0
      %p67 = por %p65, %p66
      %p68 = scmp.ne.s32.totalorder %s54, %s55
      %p69 = scmp.eq.s32.totalorder %s26, 1
      %p70 = por %p68, %p69
      %p72 = scmp.ne.s32.totalorder %s55, %s71
      %p73 = scmp.eq.s32.totalorder %s26, 0
      %p74 = por %p72, %p73
      %s75 = ssub.s32 %s20, %s27
      %p76 = scmp.eq.s32.totalorder %s75, 0
      %s78 = sadd.s32 %s77, 1
      %s79 = scalar_select %p76, %s77, %s78
      %p82 = pneg %p76
      %p83 = scmp.eq.s32.totalorder %s20, 1
      %p84 = por %p82, %p83
      %p85 = scmp.ne.s32.totalorder %s77, %s80
      %p86 = scmp.eq.s32.totalorder %s20, 0
      %p87 = por %p85, %p86
      %p88 = scmp.ne.s32.totalorder %s77, %s80
      %p89 = scmp.eq.s32.totalorder %s25, 1
      %p90 = por %p88, %p89
      %p91 = scmp.ne.s32.totalorder %s80, %s81
      %p92 = scmp.eq.s32.totalorder %s25, 0
      %p93 = por %p91, %p92
      %p94 = scmp.ne.s32.totalorder %s80, %s81
      %p95 = scmp.eq.s32.totalorder %s26, 1
      %p96 = por %p94, %p95
      %p98 = scmp.ne.s32.totalorder %s81, %s97
      %p99 = scmp.eq.s32.totalorder %s26, 0
      %p100 = por %p98, %p99
      %s101 = ssub.s32 %s20, %s27
      %p102 = scmp.eq.s32.totalorder %s101, 0
      %s104 = sadd.s32 %s103, 1
      %s105 = scalar_select %p102, %s103, %s104
      %p108 = pneg %p102
      %p109 = scmp.eq.s32.totalorder %s20, 1
      %p110 = por %p108, %p109
      %p111 = scmp.ne.s32.totalorder %s103, %s106
      %p112 = scmp.eq.s32.totalorder %s20, 0
      %p113 = por %p111, %p112
      %p114 = scmp.ne.s32.totalorder %s103, %s106
      %p115 = scmp.eq.s32.totalorder %s25, 1
      %p116 = por %p114, %p115
      %p117 = scmp.ne.s32.totalorder %s106, %s107
      %p118 = scmp.eq.s32.totalorder %s25, 0
      %p119 = por %p117, %p118
      %p120 = scmp.ne.s32.totalorder %s106, %s107
      %p121 = scmp.eq.s32.totalorder %s26, 1
      %p122 = por %p120, %p121
      %p124 = scmp.ne.s32.totalorder %s107, %s123
      %p125 = scmp.eq.s32.totalorder %s26, 0
      %p126 = por %p124, %p125
      %s127 = ssub.s32 %s20, %s27
      %p128 = scmp.eq.s32.totalorder %s127, 0
      %s130 = sadd.s32 %s129, 1
      %s131 = scalar_select %p128, %s129, %s130
      %p134 = pneg %p128
      %p135 = scmp.eq.s32.totalorder %s20, 1
      %p136 = por %p134, %p135
      %p137 = scmp.ne.s32.totalorder %s129, %s132
      %p138 = scmp.eq.s32.totalorder %s20, 0
      %p139 = por %p137, %p138
      %p140 = scmp.ne.s32.totalorder %s129, %s132
      %p141 = scmp.eq.s32.totalorder %s25, 1
      %p142 = por %p140, %p141
      %p143 = scmp.ne.s32.totalorder %s132, %s133
      %p144 = scmp.eq.s32.totalorder %s25, 0
      %p145 = por %p143, %p144
      %p146 = scmp.ne.s32.totalorder %s132, %s133
      %p147 = scmp.eq.s32.totalorder %s26, 1
      %p148 = por %p146, %p147
      %p150 = scmp.ne.s32.totalorder %s133, %s149
      %p151 = scmp.eq.s32.totalorder %s26, 0
      %p152 = por %p150, %p151
      %s154 = sadd.s32 %s153, 1
      %p157 = scmp.eq.s32.totalorder %s20, 1
      %p158 = scmp.ne.s32.totalorder %s153, %s155
      %p159 = scmp.eq.s32.totalorder %s20, 0
      %p160 = por %p158, %p159
      %p161 = scmp.ne.s32.totalorder %s153, %s155
      %p162 = scmp.eq.s32.totalorder %s25, 1
      %p163 = por %p161, %p162
      %p164 = scmp.ne.s32.totalorder %s155, %s156
      %p165 = scmp.eq.s32.totalorder %s25, 0
      %p166 = por %p164, %p165
      %p167 = scmp.ne.s32.totalorder %s155, %s156
      %p168 = scmp.eq.s32.totalorder %s26, 1
      %p169 = por %p167, %p168
      %p171 = scmp.ne.s32.totalorder %s156, %s170
      %p172 = scmp.eq.s32.totalorder %s26, 0
      %p173 = por %p171, %p172
      %s175 = sadd.s32 %s174, 1
      %p178 = scmp.eq.s32.totalorder %s20, 1
      %p179 = scmp.ne.s32.totalorder %s174, %s176
      %p180 = scmp.eq.s32.totalorder %s20, 0
      %p181 = por %p179, %p180
      %p182 = scmp.ne.s32.totalorder %s174, %s176
      %p183 = scmp.eq.s32.totalorder %s25, 1
      %p184 = por %p182, %p183
      %p185 = scmp.ne.s32.totalorder %s176, %s177
      %p186 = scmp.eq.s32.totalorder %s25, 0
      %p187 = por %p185, %p186
      %p188 = scmp.ne.s32.totalorder %s176, %s177
      %p189 = scmp.eq.s32.totalorder %s26, 1
      %p190 = por %p188, %p189
      %p192 = scmp.ne.s32.totalorder %s177, %s191
      %p193 = scmp.eq.s32.totalorder %s26, 0
      %p194 = por %p192, %p193
      %s196 = sadd.s32 %s195, 1
      %p199 = scmp.eq.s32.totalorder %s20, 1
      %p200 = scmp.ne.s32.totalorder %s195, %s197
      %p201 = scmp.eq.s32.totalorder %s20, 0
      %p202 = por %p200, %p201
      %p203 = scmp.ne.s32.totalorder %s195, %s197
      %p204 = scmp.eq.s32.totalorder %s25, 1
      %p205 = por %p203, %p204
      %p206 = scmp.ne.s32.totalorder %s197, %s198
      %p207 = scmp.eq.s32.totalorder %s25, 0
      %p208 = por %p206, %p207
      %p209 = scmp.ne.s32.totalorder %s197, %s198
      %p210 = scmp.eq.s32.totalorder %s26, 1
      %p211 = por %p209, %p210
      %p213 = scmp.ne.s32.totalorder %s198, %s212
      %p214 = scmp.eq.s32.totalorder %s26, 0
      %p215 = por %p213, %p214
      %s217 = sadd.s32 %s216, 1
      %p220 = scmp.eq.s32.totalorder %s20, 1
      %p221 = scmp.ne.s32.totalorder %s216, %s218
      %p222 = scmp.eq.s32.totalorder %s20, 0
      %p223 = por %p221, %p222
      %p224 = scmp.ne.s32.totalorder %s216, %s218
      %p225 = scmp.eq.s32.totalorder %s25, 1
      %p226 = por %p224, %p225
      %p227 = scmp.ne.s32.totalorder %s218, %s219
      %p228 = scmp.eq.s32.totalorder %s25, 0
      %p229 = por %p227, %p228
      %p230 = scmp.ne.s32.totalorder %s218, %s219
      %p231 = scmp.eq.s32.totalorder %s26, 1
      %p232 = por %p230, %p231
      %p234 = scmp.ne.s32.totalorder %s219, %s233
      %p235 = scmp.eq.s32.totalorder %s26, 0
      %p236 = por %p234, %p235
      %s237 = ssub.s32 %s20, %s27
      %p238 = scmp.eq.s32.totalorder %s237, 0
      %s240 = sadd.s32 %s239, 1
      %s241 = scalar_select %p238, %s239, %s240
      %p244 = pneg %p238
      %p245 = scmp.eq.s32.totalorder %s20, 1
      %p246 = por %p244, %p245
      %p247 = scmp.ne.s32.totalorder %s239, %s242
      %p248 = scmp.eq.s32.totalorder %s20, 0
      %p249 = por %p247, %p248
      %p250 = scmp.ne.s32.totalorder %s239, %s242
      %p251 = scmp.eq.s32.totalorder %s25, 1
      %p252 = por %p250, %p251
      %p253 = scmp.ne.s32.totalorder %s242, %s243
      %p254 = scmp.eq.s32.totalorder %s25, 0
      %p255 = por %p253, %p254
      %p256 = scmp.ne.s32.totalorder %s242, %s243
      %p257 = scmp.eq.s32.totalorder %s26, 1
      %p258 = por %p256, %p257
      %p260 = scmp.ne.s32.totalorder %s243, %s259
      %p261 = scmp.eq.s32.totalorder %s26, 0
      %p262 = por %p260, %p261
      %s263 = ssub.s32 %s20, %s27
      %p264 = scmp.eq.s32.totalorder %s263, 0
      %s266 = sadd.s32 %s265, 1
      %s267 = scalar_select %p264, %s265, %s266
      %p270 = pneg %p264
      %p271 = scmp.eq.s32.totalorder %s20, 1
      %p272 = por %p270, %p271
      %p273 = scmp.ne.s32.totalorder %s265, %s268
      %p274 = scmp.eq.s32.totalorder %s20, 0
      %p275 = por %p273, %p274
      %p276 = scmp.ne.s32.totalorder %s265, %s268
      %p277 = scmp.eq.s32.totalorder %s25, 1
      %p278 = por %p276, %p277
      %p279 = scmp.ne.s32.totalorder %s268, %s269
      %p280 = scmp.eq.s32.totalorder %s25, 0
      %p281 = por %p279, %p280
      %p282 = scmp.ne.s32.totalorder %s268, %s269
      %p283 = scmp.eq.s32.totalorder %s26, 1
      %p284 = por %p282, %p283
      %p286 = scmp.ne.s32.totalorder %s269, %s285
      %p287 = scmp.eq.s32.totalorder %s26, 0
      %p288 = por %p286, %p287
      %s289 = ssub.s32 %s20, %s27
      %p290 = scmp.eq.s32.totalorder %s289, 0
      %s292 = sadd.s32 %s291, 1
      %s293 = scalar_select %p290, %s291, %s292
      %p296 = pneg %p290
      %p297 = scmp.eq.s32.totalorder %s20, 1
      %p298 = por %p296, %p297
      %p299 = scmp.ne.s32.totalorder %s291, %s294
      %p300 = scmp.eq.s32.totalorder %s20, 0
      %p301 = por %p299, %p300
      %p302 = scmp.ne.s32.totalorder %s291, %s294
      %p303 = scmp.eq.s32.totalorder %s25, 1
      %p304 = por %p302, %p303
      %p305 = scmp.ne.s32.totalorder %s294, %s295
      %p306 = scmp.eq.s32.totalorder %s25, 0
      %p307 = por %p305, %p306
      %p308 = scmp.ne.s32.totalorder %s294, %s295
      %p309 = scmp.eq.s32.totalorder %s26, 1
      %p310 = por %p308, %p309
      %p312 = scmp.ne.s32.totalorder %s295, %s311
      %p313 = scmp.eq.s32.totalorder %s26, 0
      %p314 = por %p312, %p313
      %s315 = ssub.s32 %s20, %s27
      %p316 = scmp.eq.s32.totalorder %s315, 0
      %s318 = sadd.s32 %s317, 1
      %s319 = scalar_select %p316, %s317, %s318
      %p322 = pneg %p316
      %p323 = scmp.eq.s32.totalorder %s20, 1
      %p324 = por %p322, %p323
      %p325 = scmp.ne.s32.totalorder %s317, %s320
      %p326 = scmp.eq.s32.totalorder %s20, 0
      %p327 = por %p325, %p326
      %p328 = scmp.ne.s32.totalorder %s317, %s320
      %p329 = scmp.eq.s32.totalorder %s25, 1
      %p330 = por %p328, %p329
      %p331 = scmp.ne.s32.totalorder %s320, %s321
      %p332 = scmp.eq.s32.totalorder %s25, 0
      %p333 = por %p331, %p332
      %p334 = scmp.ne.s32.totalorder %s320, %s321
      %p335 = scmp.eq.s32.totalorder %s26, 1
      %p336 = por %p334, %p335
      %p338 = scmp.ne.s32.totalorder %s321, %s337
      %p339 = scmp.eq.s32.totalorder %s26, 0
      %p340 = por %p338, %p339
      %p341 = scmp.le.s32.totalorder 1, %s20
      %p342 = scmp.lt.s32.totalorder %s20, 3
      %p343 = pnand %p341, %p342
      %p344 = pneg %p343
      // Predicated region
      $region9: #{rnnprop_step.1} parent=5 // pred_check
        _
      $region10: #{rnnprop_step.1} parent=5 // pred_check_branch
        %346 = sbr.rel (%p343) target = $region12
      $region11: #{rnnprop_step.1} parent=5 // pred_region
        %s347 = ssub.s32 %s20, 1
        // Predicated region
        $region13: #{rnnprop_step.1} parent=11 // pred_check
          %p348 = pneg %p41
        $region14: #{rnnprop_step.1} parent=11 // pred_check_branch
          %350 = sbr.rel (%p348) target = $region16
        $region15: #{rnnprop_step.1} parent=11 // pred_region
          %352 = vsyncadd [#allocation3], 0
          %s354 = sshll.u32 %s0, 4
          %s355 = int_to_ptr.vmem [resolvable:$true] %s354
          %357 = dma.vmem_to_smem %s355, 16, [#allocation2], [#allocation3]
        $region16: #{rnnprop_step.1} parent=11 // pred_fallthru
          _
        // Predicated region
        $region17: #{rnnprop_step.1} parent=11 // pred_check
          %p358 = pneg %p166
        $region18: #{rnnprop_step.1} parent=11 // pred_check_branch
          %360 = sbr.rel (%p358) target = $region20
        $region19: #{rnnprop_step.1} parent=11 // pred_region
          _
        $region20: #{rnnprop_step.1} parent=11 // pred_fallthru
          _
        // Predicated region
        $region21: #{rnnprop_step.1} parent=11 // pred_check
          %p361 = pneg %p187
        $region22: #{rnnprop_step.1} parent=11 // pred_check_branch
          %363 = sbr.rel (%p361) target = $region24
        $region23: #{rnnprop_step.1} parent=11 // pred_region
          _
        $region24: #{rnnprop_step.1} parent=11 // pred_fallthru
          _
        // Predicated region
        $region25: #{rnnprop_step.1} parent=11 // pred_check
          %p364 = pneg %p208
        $region26: #{rnnprop_step.1} parent=11 // pred_check_branch
          %366 = sbr.rel (%p364) target = $region28
        $region27: #{rnnprop_step.1} parent=11 // pred_region
          _
        $region28: #{rnnprop_step.1} parent=11 // pred_fallthru
          _
        // Predicated region
        $region29: #{rnnprop_step.1} parent=11 // pred_check
          %p367 = pneg %p229
        $region30: #{rnnprop_step.1} parent=11 // pred_check_branch
          %369 = sbr.rel (%p367) target = $region32
        $region31: #{rnnprop_step.1} parent=11 // pred_region
          _
        $region32: #{rnnprop_step.1} parent=11 // pred_fallthru
          _
      $region12: #{rnnprop_step.1} parent=5 // pred_fallthru
        _
      %p370 = scmp.lt.s32.totalorder %s20, 2
      // Predicated region
      $region33: #{rnnprop_step.1} parent=5 // pred_check
        %p371 = pneg %p370
      $region34: #{rnnprop_step.1} parent=5 // pred_check_branch
        %373 = sbr.rel (%p371) target = $region36
      $region35: #{rnnprop_step.1} parent=5 // pred_region
        // Predicated region
        $region37: #{rnnprop_step.1} parent=35 // pred_check
          %p374 = pneg %p61
        $region38: #{rnnprop_step.1} parent=35 // pred_check_branch
          %376 = sbr.rel (%p374) target = $region40
        $region39: #{rnnprop_step.1} parent=35 // pred_region
          %p377 = scmp.lt.s32.totalorder %s20, 1
          %s378 = scalar_select %p377, %s20, 1
          %s379 = scalar_lea.vmem %s1, %s378
        $region40: #{rnnprop_step.1} parent=35 // pred_fallthru
          _
        // Predicated region
        $region41: #{rnnprop_step.1} parent=35 // pred_check
          %p380 = pneg %p87
        $region42: #{rnnprop_step.1} parent=35 // pred_check_branch
          %382 = sbr.rel (%p380) target = $region44
        $region43: #{rnnprop_step.1} parent=35 // pred_region
          %p383 = scmp.lt.s32.totalorder %s20, 1
          %s384 = scalar_select %p383, %s20, 1
          %s385 = scalar_lea.vmem %s2, %s384
        $region44: #{rnnprop_step.1} parent=35 // pred_fallthru
          _
        // Predicated region
        $region45: #{rnnprop_step.1} parent=35 // pred_check
          %p386 = pneg %p113
        $region46: #{rnnprop_step.1} parent=35 // pred_check_branch
          %388 = sbr.rel (%p386) target = $region48
        $region47: #{rnnprop_step.1} parent=35 // pred_region
          %p389 = scmp.lt.s32.totalorder %s20, 1
          %s390 = scalar_select %p389, %s20, 1
          %s391 = scalar_lea.vmem %s3, %s390
        $region48: #{rnnprop_step.1} parent=35 // pred_fallthru
          _
        // Predicated region
        $region49: #{rnnprop_step.1} parent=35 // pred_check
          %p392 = pneg %p139
        $region50: #{rnnprop_step.1} parent=35 // pred_check_branch
          %394 = sbr.rel (%p392) target = $region52
        $region51: #{rnnprop_step.1} parent=35 // pred_region
          %s395 = sand.u32 %s129, 1
          %s396 = sand.u32 %s129, 1
          %s397 = smul.addr %s396, 64
          %s398 = scalar_lea.vmem [#allocation4], %s397
          %s399 = smul.addr %s20, 4
          %s400 = scalar_lea.vmem %s4, %s399
          // Predicated region
          $region53: #{rnnprop_step.1} parent=51 // pred_check
            _
          $region54: #{rnnprop_step.1} parent=51 // pred_check_branch
            %402 = sbr.rel (0) target = $region56
          $region55: #{rnnprop_step.1} parent=51 // pred_region
            // Predicated region
            $region57: #{rnnprop_step.1} parent=55 // pred_check
              _
            $region58: #{rnnprop_step.1} parent=55 // pred_check_branch
              %404 = sbr.rel target = $region60
            $region59: #{rnnprop_step.1} parent=55 // pred_region
              // Predicated region
              $region72: #{rnnprop_step.1} parent=59 // pred_check
                _
              $region73: #{rnnprop_step.1} parent=59 // pred_check_branch
                %450 = sbr.rel (0) target = $region75
              $region74: #{rnnprop_step.1} parent=59 // pred_region
                loop: start=0, step=1, limit=1
                $region76: #{rnnprop_step.1} parent=74 // loop_pre_header
                  _
                $region77: #{rnnprop_step.1} parent=74 // loop_header
                  %s452 = sphi 0, %s456
                  %p453 = scmp.ge.s32.totalorder %s452, 1
                  %s457 = sphi %s400, %s400
                  %s458 = sphi %s398, %s398
                $region78: #{rnnprop_step.1} parent=74 // loop_header_branch
                  %455 = sbr.rel (%p453) target = $region82
                $region79: #{rnnprop_step.1} parent=74 // loop_body
                  _
                $region80: #{rnnprop_step.1} parent=74 // loop_footer
                  %s456 = sadd.s32 1, %s452
                $region81: #{rnnprop_step.1} parent=74 // loop_footer_branch
                  %451 = sbr.rel target = $region77
                $region82: #{rnnprop_step.1} parent=74 // loop_exit
                  _
                %s460 = ssub.s32 16, 1
                loop: start=0, step=1, limit=1
                $region83: #{rnnprop_step.1} parent=74 // loop_pre_header
                  _
                $region84: #{rnnprop_step.1} parent=74 // loop_header
                  %s462 = sphi 0, %s466
                  %p463 = scmp.ge.s32.totalorder %s462, 1
                  %s467 = sphi %s400, %s400
                  %s468 = sphi %s398, %s398
                $region85: #{rnnprop_step.1} parent=74 // loop_header_branch
                  %465 = sbr.rel (%p463) target = $region89
                $region86: #{rnnprop_step.1} parent=74 // loop_body
                  %v469 = vld [vmem:[%s467] sm:%s460]
                  %470 = vst [vmem:[%s468] sm:%s460] %v469
                  %v471 = vld [vmem:[%s467 + $0x8] sm:%s460]
                  %472 = vst [vmem:[%s468 + $0x4] sm:%s460] %v471
                  %v473 = vld [vmem:[%s467 + $0x10] sm:%s460]
                  %474 = vst [vmem:[%s468 + $0x8] sm:%s460] %v473
                  %v475 = vld [vmem:[%s467 + $0x18] sm:%s460]
                  %476 = vst [vmem:[%s468 + $0xc] sm:%s460] %v475
                  %v477 = vld [vmem:[%s467 + $0x20] sm:%s460]
                  %478 = vst [vmem:[%s468 + $0x10] sm:%s460] %v477
                  %v479 = vld [vmem:[%s467 + $0x28] sm:%s460]
                  %480 = vst [vmem:[%s468 + $0x14] sm:%s460] %v479
                  %v481 = vld [vmem:[%s467 + $0x30] sm:%s460]
                  %482 = vst [vmem:[%s468 + $0x18] sm:%s460] %v481
                  %v483 = vld [vmem:[%s467 + $0x38] sm:%s460]
                  %484 = vst [vmem:[%s468 + $0x1c] sm:%s460] %v483
                  %v485 = vld [vmem:[%s467 + $0x40] sm:%s460]
                  %486 = vst [vmem:[%s468 + $0x20] sm:%s460] %v485
                  %v487 = vld [vmem:[%s467 + $0x48] sm:%s460]
                  %488 = vst [vmem:[%s468 + $0x24] sm:%s460] %v487
                  %v489 = vld [vmem:[%s467 + $0x50] sm:%s460]
                  %490 = vst [vmem:[%s468 + $0x28] sm:%s460] %v489
                  %v491 = vld [vmem:[%s467 + $0x58] sm:%s460]
                  %492 = vst [vmem:[%s468 + $0x2c] sm:%s460] %v491
                  %v493 = vld [vmem:[%s467 + $0x60] sm:%s460]
                  %494 = vst [vmem:[%s468 + $0x30] sm:%s460] %v493
                  %v495 = vld [vmem:[%s467 + $0x68] sm:%s460]
                  %496 = vst [vmem:[%s468 + $0x34] sm:%s460] %v495
                  %v497 = vld [vmem:[%s467 + $0x70] sm:%s460]
                  %498 = vst [vmem:[%s468 + $0x38] sm:%s460] %v497
                  %v499 = vld [vmem:[%s467 + $0x78] sm:%s460]
                  %500 = vst [vmem:[%s468 + $0x3c] sm:%s460] %v499
                $region87: #{rnnprop_step.1} parent=74 // loop_footer
                  %s466 = sadd.s32 1, %s462
                $region88: #{rnnprop_step.1} parent=74 // loop_footer_branch
                  %461 = sbr.rel target = $region84
                $region89: #{rnnprop_step.1} parent=74 // loop_exit
                  _
              $region75: #{rnnprop_step.1} parent=59 // pred_fallthru
                _
            $region60: #{rnnprop_step.1} parent=55 // pred_fallthru
              _
            // Predicated region
            $region61: #{rnnprop_step.1} parent=55 // pred_check
              _
            $region62: #{rnnprop_step.1} parent=55 // pred_check_branch
              %406 = sbr.rel (0) target = $region64
            $region63: #{rnnprop_step.1} parent=55 // pred_region
              %s408 = ssub.s32 16, 1
              loop: start=0, step=1, limit=1
              $region65: #{rnnprop_step.1} parent=63 // loop_pre_header
                _
              $region66: #{rnnprop_step.1} parent=63 // loop_header
                %s410 = sphi 0, %s414
                %p411 = scmp.ge.s32.totalorder %s410, 1
                %s415 = sphi %s400, %s400
                %s416 = sphi %s398, %s398
              $region67: #{rnnprop_step.1} parent=63 // loop_header_branch
                %413 = sbr.rel (%p411) target = $region71
              $region68: #{rnnprop_step.1} parent=63 // loop_body
                %v417 = vld [vmem:[%s415] sm:%s408]
                %418 = vst [vmem:[%s416] sm:%s408] %v417
                %v419 = vld [vmem:[%s415 + $0x8] sm:%s408]
                %420 = vst [vmem:[%s416 + $0x4] sm:%s408] %v419
                %v421 = vld [vmem:[%s415 + $0x10] sm:%s408]
                %422 = vst [vmem:[%s416 + $0x8] sm:%s408] %v421
                %v423 = vld [vmem:[%s415 + $0x18] sm:%s408]
                %424 = vst [vmem:[%s416 + $0xc] sm:%s408] %v423
                %v425 = vld [vmem:[%s415 + $0x20] sm:%s408]
                %426 = vst [vmem:[%s416 + $0x10] sm:%s408] %v425
                %v427 = vld [vmem:[%s415 + $0x28] sm:%s408]
                %428 = vst [vmem:[%s416 + $0x14] sm:%s408] %v427
                %v429 = vld [vmem:[%s415 + $0x30] sm:%s408]
                %430 = vst [vmem:[%s416 + $0x18] sm:%s408] %v429
                %v431 = vld [vmem:[%s415 + $0x38] sm:%s408]
                %432 = vst [vmem:[%s416 + $0x1c] sm:%s408] %v431
                %v433 = vld [vmem:[%s415 + $0x40] sm:%s408]
                %434 = vst [vmem:[%s416 + $0x20] sm:%s408] %v433
                %v435 = vld [vmem:[%s415 + $0x48] sm:%s408]
                %436 = vst [vmem:[%s416 + $0x24] sm:%s408] %v435
                %v437 = vld [vmem:[%s415 + $0x50] sm:%s408]
                %438 = vst [vmem:[%s416 + $0x28] sm:%s408] %v437
                %v439 = vld [vmem:[%s415 + $0x58] sm:%s408]
                %440 = vst [vmem:[%s416 + $0x2c] sm:%s408] %v439
                %v441 = vld [vmem:[%s415 + $0x60] sm:%s408]
                %442 = vst [vmem:[%s416 + $0x30] sm:%s408] %v441
                %v443 = vld [vmem:[%s415 + $0x68] sm:%s408]
                %444 = vst [vmem:[%s416 + $0x34] sm:%s408] %v443
                %v445 = vld [vmem:[%s415 + $0x70] sm:%s408]
                %446 = vst [vmem:[%s416 + $0x38] sm:%s408] %v445
                %v447 = vld [vmem:[%s415 + $0x78] sm:%s408]
                %448 = vst [vmem:[%s416 + $0x3c] sm:%s408] %v447
              $region69: #{rnnprop_step.1} parent=63 // loop_footer
                %s414 = sadd.s32 1, %s410
              $region70: #{rnnprop_step.1} parent=63 // loop_footer_branch
                %409 = sbr.rel target = $region66
              $region71: #{rnnprop_step.1} parent=63 // loop_exit
                _
            $region64: #{rnnprop_step.1} parent=55 // pred_fallthru
              _
          $region56: #{rnnprop_step.1} parent=51 // pred_fallthru
            _
          %501 = vnop
        $region52: #{rnnprop_step.1} parent=35 // pred_fallthru
          _
      $region36: #{rnnprop_step.1} parent=5 // pred_fallthru
        _
      %p502 = scmp.le.s32.totalorder 1, %s20
      %p503 = scmp.lt.s32.totalorder %s20, 3
      %p504 = pnand %p502, %p503
      %p505 = pneg %p504
      // Predicated region
      $region90: #{rnnprop_step.1} parent=5 // pred_check
        _
      $region91: #{rnnprop_step.1} parent=5 // pred_check_branch
        %507 = sbr.rel (%p504) target = $region93
      $region92: #{rnnprop_step.1} parent=5 // pred_region
        %s508 = ssub.s32 %s20, 1
        // Predicated region
        $region94: #{rnnprop_step.1} parent=92 // pred_check
          %p509 = pneg %p41
        $region95: #{rnnprop_step.1} parent=92 // pred_check_branch
          %511 = sbr.rel (%p509) target = $region97
        $region96: #{rnnprop_step.1} parent=92 // pred_region
          %513 = dma.done [#allocation3], 16
        $region97: #{rnnprop_step.1} parent=92 // pred_fallthru
          _
        %s514 = sand.u32 %s132, 1
        %s515 = sand.u32 %s132, 1
        %s516 = smul.addr %s515, 64
        %s517 = scalar_lea.vmem [#allocation4], %s516
        // Predicated region
        $region98: #{rnnprop_step.1} parent=92 // pred_check
          %p518 = pneg %p145
        $region99: #{rnnprop_step.1} parent=92 // pred_check_branch
          %520 = sbr.rel (%p518) target = $region101
        $region100: #{rnnprop_step.1} parent=92 // pred_region
          _
        $region101: #{rnnprop_step.1} parent=92 // pred_fallthru
          _
        %521 = sfence
        %p522 = pneg %p41
        %p523 = pneg %p38
        %p524 = scmp.lt.s32.totalorder %s25, 1
        %s525 = scalar_select %p524, %s25, 1
        %s526 = scalar_lea.vmem %s1, %s525
        %p527 = pneg %p67
        %p528 = pneg %p64
        %p529 = scmp.lt.s32.totalorder %s25, 1
        %s530 = scalar_select %p529, %s25, 1
        %s531 = scalar_lea.vmem %s2, %s530
        %p532 = pneg %p93
        %p533 = pneg %p90
        %p534 = scmp.lt.s32.totalorder %s25, 1
        %s535 = scalar_select %p534, %s25, 1
        %s536 = scalar_lea.vmem %s3, %s535
        %p537 = pneg %p119
        %p538 = pneg %p116
        %s539 = sand.u32 %s132, 1
        %s540 = sand.u32 %s132, 1
        %s541 = smul.addr %s540, 64
        %s542 = scalar_lea.vmem [#allocation4], %s541
        %p543 = pneg %p145
        %p544 = pneg %p142
        %p545 = pneg %p166
        %p546 = pneg %p163
        %p547 = pneg %p187
        %p548 = pneg %p184
        %p549 = pneg %p208
        %p550 = pneg %p205
        %p551 = pneg %p229
        %p552 = pneg %p226
        %p553 = pneg %p255
        %p554 = pneg %p252
        %p555 = scmp.lt.s32.totalorder %s25, 1
        %s556 = scalar_select %p555, %s25, 1
        %s557 = scalar_lea.vmem %s9, %s556
        %p558 = pneg %p281
        %p559 = pneg %p278
        %p560 = scmp.lt.s32.totalorder %s25, 1
        %s561 = scalar_select %p560, %s25, 1
        %s562 = scalar_lea.vmem %s10, %s561
        %p563 = pneg %p307
        %p564 = pneg %p304
        %p565 = scmp.lt.s32.totalorder %s25, 1
        %s566 = scalar_select %p565, %s25, 1
        %s567 = scalar_lea.vmem %s11, %s566
        %p568 = pneg %p333
        %p569 = pneg %p330
        %s570 = sand.u32 %s320, 1
        %s571 = sand.u32 %s320, 1
        %s572 = smul.addr %s571, 64
        %s573 = scalar_lea.vmem [#allocation5], %s572
        %p574 = scmp.lt.s32.totalorder %s25, 1
        %s575 = scalar_select %p574, %s25, 1
        %s576 = scalar_lea.vmem %s1, %s575
        %p577 = scmp.lt.s32.totalorder %s25, 1
        %s578 = scalar_select %p577, %s25, 1
        %s579 = scalar_lea.vmem %s2, %s578
        %p580 = scmp.lt.s32.totalorder %s25, 1
        %s581 = scalar_select %p580, %s25, 1
        %s582 = scalar_lea.vmem %s3, %s581
        %p583 = scmp.lt.s32.totalorder %s25, 1
        %s584 = scalar_select %p583, %s25, 1
        %s585 = scalar_lea.vmem %s9, %s584
        %p586 = scmp.lt.s32.totalorder %s25, 1
        %s587 = scalar_select %p586, %s25, 1
        %s588 = scalar_lea.vmem %s10, %s587
        %p589 = scmp.lt.s32.totalorder %s25, 1
        %s590 = scalar_select %p589, %s25, 1
        %s591 = scalar_lea.vmem %s11, %s590
        %s592 = sld [smem:[#allocation2]]
        %s593 = sld [smem:[#allocation2 + $0x1]]
        %s594 = sld [smem:[#allocation2 + $0x2]]
        %s595 = smul.f32 %s594, %s592
        %s596 = sld [smem:[#allocation2 + $0x3]]
        %s597 = smul.f32 %s596, %s593
        %s598 = sld [smem:[#allocation2 + $0x4]]
        %s599 = sld [smem:[#allocation2 + $0x5]]
        %v600 = vld [vmem:[%s576] sm:$0x1]
        %v601 = vld [vmem:[%s579] sm:$0x1]
        %v602 = vstv %s592
        %v603 = vmul.f32 %v602, %v601
        %s604 = ssub.f32 1.0, %s592
        %v605 = vstv %s604
        %v606 = vmul.f32 %v605, %v600
        %v607 = vadd.f32 %v603, %v606
        %v608 = vld [vmem:[%s582] sm:$0x1]
        %v609 = vstv %s593
        %v610 = vmul.f32 %v609, %v608
        %s611 = ssub.f32 1.0, %s593
        %v612 = vstv %s611
        %v613 = vmul.f32 %v612, %v600
        %v614 = vmul.f32 %v613, %v600
        %v615 = vadd.f32 %v610, %v614
        %s616 = ssub.f32 1.0, %s595
        %v617 = vstv %s616
        %v618 = vrcp.pop %v617
        %v619 = vmul.f32 %v617, %v618
        %v620 = vsub.f32 1.0, %v619
        %v621 = vmul.f32 %v618, %v620
        %v622 = vadd.f32 %v618, %v621
        %vm623 = vweird.f32 %v617
        %vm624 = vweird.f32 %v618
        %vm625 = vmor %vm623, %vm624
        %v626 = vsel %vm625, %v618, %v622
        %v627 = vand.u32 2147483647, %v617
        %vm628 = vcmp.eq.f32.partialorder %v627, 8.507059e+37
        %v629 = vand.u32 %v617, 2147483648
        %v630 = vor.u32 1.1754944e-38, %v629
        %v631 = vsel %vm628, %v630, %v626
        %s632 = vtos %v631
        %s633 = ssub.f32 1.0, %s597
        %v634 = vstv %s633
        %v635 = vrcp.pop %v634
        %v636 = vmul.f32 %v634, %v635
        %v637 = vsub.f32 1.0, %v636
        %v638 = vmul.f32 %v635, %v637
        %v639 = vadd.f32 %v635, %v638
        %vm640 = vweird.f32 %v634
        %vm641 = vweird.f32 %v635
        %vm642 = vmor %vm640, %vm641
        %v643 = vsel %vm642, %v635, %v639
        %v644 = vand.u32 2147483647, %v634
        %vm645 = vcmp.eq.f32.partialorder %v644, 8.507059e+37
        %v646 = vand.u32 %v634, 2147483648
        %v647 = vor.u32 1.1754944e-38, %v646
        %v648 = vsel %vm645, %v647, %v643
        %s649 = vtos %v648
        %v650 = vstv %s649
        %v651 = vmul.f32 %v615, %v650
        %v652 = vrsqrt.pop %v651
        %v653 = vmul.f32 %v652, %v651
        %v654 = vmul.f32 %v653, %v652
        %v655 = vmul.f32 0.5, %v654
        %v656 = vsub.f32 1.5, %v655
        %v657 = vmul.f32 %v652, %v656
        %v658 = vmul.f32 %v651, %v657
        %vm659 = vcmp.eq.f32.partialorder %v651, inf
        %v660 = vsel %vm659, %v651, %v658
        %vm661 = vcmp.eq.f32.partialorder %v651, 0.0
        %v662 = vand.u32 %v651, 2147483648
        %v663 = vsel %vm661, %v662, %v660
        %v664 = vadd.f32 %v663, 1e-08
        %v665 = vrcp.pop %v664
        %v666 = vmul.f32 %v664, %v665
        %v667 = vsub.f32 1.0, %v666
        %v668 = vmul.f32 %v665, %v667
        %v669 = vadd.f32 %v665, %v668
        %vm670 = vweird.f32 %v664
        %vm671 = vweird.f32 %v665
        %vm672 = vmor %vm670, %vm671
        %v673 = vsel %vm672, %v665, %v669
        %v674 = vand.u32 2147483647, %v664
        %vm675 = vcmp.eq.f32.partialorder %v674, 8.507059e+37
        %v676 = vand.u32 %v664, 2147483648
        %v677 = vor.u32 1.1754944e-38, %v676
        %v678 = vsel %vm675, %v677, %v673
        %v679 = vmul.f32 %v600, %v678
        %v680 = vstv %s632
        %v681 = vmul.f32 %v607, %v680
        %v682 = vmul.f32 %v681, %v678
        %v683 = vld [vmem:[%s5] sm:$0xff]
        %v684 = vld [vmem:[%s5 + $0x8] sm:$0xff]
        %v685 = vld [vmem:[%s5 + $0x10] sm:$0xff]
        %v686 = vld [vmem:[%s5 + $0x18] sm:$0xff]
        %v687 = vld [vmem:[%s5 + $0x20] sm:$0xff]
        %v688 = vld [vmem:[%s5 + $0x28] sm:$0xff]
        %v689 = vld [vmem:[%s5 + $0x30] sm:$0xff]
        %v690 = vld [vmem:[%s5 + $0x38] sm:$0xff]
        %v691 = vld [vmem:[%s5 + $0x40] sm:$0xff]
        %v692 = vld [vmem:[%s5 + $0x48] sm:$0xff]
        %v693 = vld [vmem:[%s5 + $0x50] sm:$0xff]
        %v694 = vld [vmem:[%s5 + $0x58] sm:$0xff]
        %v695 = vld [vmem:[%s5 + $0x60] sm:$0xff]
        %v696 = vld [vmem:[%s5 + $0x68] sm:$0xff]
        %v697 = vld [vmem:[%s5 + $0x70] sm:$0xff]
        %v698 = vld [vmem:[%s5 + $0x78] sm:$0xff]
        %700 = vset.pattern.permute.xlu0 0
        %701 = vperm.xlu0 %700, %v683
        %v702 = vpop.permute.xlu0 %701
        %705 = vset.pattern.permute.xlu0 0
        %706 = vperm.xlu0 %705, %v684
        %v707 = vpop.permute.xlu0 %706
        %710 = vset.pattern.permute.xlu0 0
        %711 = vperm.xlu0 %710, %v685
        %v712 = vpop.permute.xlu0 %711
        %715 = vset.pattern.permute.xlu0 0
        %716 = vperm.xlu0 %715, %v686
        %v717 = vpop.permute.xlu0 %716
        %v720 = vperm.slane %v679, 0
        %v722 = vmul.f32 %v702, %v720
        %v723 = vmul.f32 %v707, %v720
        %v724 = vmul.f32 %v712, %v720
        %v725 = vmul.f32 %v717, %v720
        %727 = vset.pattern.permute.xlu0 0
        %728 = vperm.xlu0 %727, %v687
        %v729 = vpop.permute.xlu0 %728
        %732 = vset.pattern.permute.xlu0 0
        %733 = vperm.xlu0 %732, %v688
        %v734 = vpop.permute.xlu0 %733
        %737 = vset.pattern.permute.xlu0 0
        %738 = vperm.xlu0 %737, %v689
        %v739 = vpop.permute.xlu0 %738
        %742 = vset.pattern.permute.xlu0 0
        %743 = vperm.xlu0 %742, %v690
        %v744 = vpop.permute.xlu0 %743
        %v747 = vperm.slane %v682, 0
        %v749 = vmul.f32 %v729, %v747
        %v750 = vmul.f32 %v734, %v747
        %v751 = vmul.f32 %v739, %v747
        %v752 = vmul.f32 %v744, %v747
        %v753 = vadd.f32 %v722, %v749
        %v754 = vadd.f32 %v723, %v750
        %v755 = vadd.f32 %v724, %v751
        %v756 = vadd.f32 %v725, %v752
        %758 = vset.pattern.permute.xlu0 0
        %759 = vperm.xlu0 %758, %v691
        %v760 = vpop.permute.xlu0 %759
        %763 = vset.pattern.permute.xlu0 0
        %764 = vperm.xlu0 %763, %v692
        %v765 = vpop.permute.xlu0 %764
        %768 = vset.pattern.permute.xlu0 0
        %769 = vperm.xlu0 %768, %v693
        %v770 = vpop.permute.xlu0 %769
        %773 = vset.pattern.permute.xlu0 0
        %774 = vperm.xlu0 %773, %v694
        %v775 = vpop.permute.xlu0 %774
        %v777 = vadd.f32 %v753, %v760
        %v778 = vadd.f32 %v754, %v765
        %v779 = vadd.f32 %v755, %v770
        %v780 = vadd.f32 %v756, %v775
        %vm781 = vcmp.gt.f32.partialorder %v777, 0.0
        %vm782 = vcmp.gt.f32.partialorder %v778, 0.0
        %vm783 = vcmp.gt.f32.partialorder %v779, 0.0
        %vm784 = vcmp.gt.f32.partialorder %v780, 0.0
        %v785 = vmin.f32 %v777, 0.0
        %v786 = vmin.f32 %v778, 0.0
        %v787 = vmin.f32 %v779, 0.0
        %v788 = vmin.f32 %v780, 0.0
        %v789 = vmul.f32 %v785, 1.442695
        %v790 = vpow.pop %v789
        %v791 = vmul.f32 %v786, 1.442695
        %v792 = vpow.pop %v791
        %v793 = vmul.f32 %v787, 1.442695
        %v794 = vpow.pop %v793
        %v795 = vmul.f32 %v788, 1.442695
        %v796 = vpow.pop %v795
        %v797 = vsub.f32 %v790, 1.0
        %v798 = vsub.f32 %v792, 1.0
        %v799 = vsub.f32 %v794, 1.0
        %v800 = vsub.f32 %v796, 1.0
        %v801 = vsel %vm781, %v777, %v797
        %v802 = vsel %vm782, %v778, %v798
        %v803 = vsel %vm783, %v779, %v799
        %v804 = vsel %vm784, %v780, %v800
        %v805 = vld [vmem:[%s517] sm:$0xf]
        %v806 = vld [vmem:[%s517 + $0x4] sm:$0xf]
        %v807 = vld [vmem:[%s517 + $0x8] sm:$0xf]
        %v808 = vld [vmem:[%s517 + $0xc] sm:$0xf]
        %v809 = vunpack.c.l.bf16 %v805
        %v810 = vunpack.c.l.bf16 %v806
        %v811 = vunpack.c.l.bf16 %v807
        %v812 = vunpack.c.l.bf16 %v808
        %v813 = vld [vmem:[%s517 + $0x20] sm:$0xf]
        %v814 = vld [vmem:[%s517 + $0x24] sm:$0xf]
        %v815 = vld [vmem:[%s517 + $0x28] sm:$0xf]
        %v816 = vld [vmem:[%s517 + $0x2c] sm:$0xf]
        %v817 = vunpack.c.l.bf16 %v813
        %v818 = vunpack.c.l.bf16 %v814
        %v819 = vunpack.c.l.bf16 %v815
        %v820 = vunpack.c.l.bf16 %v816
        %v821 = vld [vmem:[%s6] sm:$0xff]
        %v822 = vld [vmem:[%s6 + $0x8] sm:$0xff]
        %v823 = vld [vmem:[%s6 + $0x10] sm:$0xff]
        %v824 = vld [vmem:[%s6 + $0x18] sm:$0xff]
        %v825 = vld [vmem:[%s6 + $0x20] sm:$0xff]
        %v826 = vld [vmem:[%s6 + $0x28] sm:$0xff]
        %v827 = vld [vmem:[%s6 + $0x30] sm:$0xff]
        %v828 = vld [vmem:[%s6 + $0x38] sm:$0xff]
        %v829 = vld [vmem:[%s6 + $0x40] sm:$0xff]
        %v830 = vld [vmem:[%s6 + $0x48] sm:$0xff]
        %v831 = vld [vmem:[%s6 + $0x50] sm:$0xff]
        %v832 = vld [vmem:[%s6 + $0x58] sm:$0xff]
        %v833 = vld [vmem:[%s6 + $0x60] sm:$0xff]
        %v834 = vld [vmem:[%s6 + $0x68] sm:$0xff]
        %v835 = vld [vmem:[%s6 + $0x70] sm:$0xff]
        %v836 = vld [vmem:[%s6 + $0x78] sm:$0xff]
        %v837 = vld [vmem:[%s7] sm:$0xff]
        %v838 = vld [vmem:[%s7 + $0x8] sm:$0xff]
        %v839 = vld [vmem:[%s7 + $0x10] sm:$0xff]
        %v840 = vld [vmem:[%s7 + $0x18] sm:$0xff]
        %v841 = vld [vmem:[%s7 + $0x20] sm:$0xff]
        %v842 = vld [vmem:[%s7 + $0x28] sm:$0xff]
        %v843 = vld [vmem:[%s7 + $0x30] sm:$0xff]
        %v844 = vld [vmem:[%s7 + $0x38] sm:$0xff]
        %v845 = vld [vmem:[%s7 + $0x40] sm:$0xff]
        %v846 = vld [vmem:[%s7 + $0x48] sm:$0xff]
        %v847 = vld [vmem:[%s7 + $0x50] sm:$0xff]
        %v848 = vld [vmem:[%s7 + $0x58] sm:$0xff]
        %v849 = vld [vmem:[%s7 + $0x60] sm:$0xff]
        %v850 = vld [vmem:[%s7 + $0x68] sm:$0xff]
        %v851 = vld [vmem:[%s7 + $0x70] sm:$0xff]
        %v852 = vld [vmem:[%s7 + $0x78] sm:$0xff]
        %vm853 = vcmask 261120
        %v855 = vsel %vm853, %v837, 0
        %v858 = vsel %vm853, %v838, 0
        %v861 = vsel %vm853, %v839, 0
        %v864 = vsel %vm853, %v840, 0
        %v867 = vsel %vm853, %v841, 0
        %v870 = vsel %vm853, %v842, 0
        %v873 = vsel %vm853, %v843, 0
        %v876 = vsel %vm853, %v844, 0
        %v879 = vsel %vm853, %v845, 0
        %v882 = vsel %vm853, %v846, 0
        %v885 = vsel %vm853, %v847, 0
        %v888 = vsel %vm853, %v848, 0
        %v891 = vsel %vm853, %v849, 0
        %v894 = vsel %vm853, %v850, 0
        %v897 = vsel %vm853, %v851, 0
        %v900 = vsel %vm853, %v852, 0
        %902 = vmatpush.msra.mxu0 0.0
        %903 = vmatpush.msra.mxu0 0.0
        %904 = vmatpush.msra.mxu0 0.0
        %905 = vmatpush.msra.mxu0 0.0
        %906 = vmatpush.msra.mxu0 0.0
        %907 = vmatpush.msra.mxu0 0.0
        %908 = vmatpush.msra.mxu0 0.0
        %909 = vmatpush.msra.mxu0 0.0
        %910 = vmatpush.msra.mxu0 0.0
        %911 = vmatpush.msra.mxu0 0.0
        %912 = vmatpush.msra.mxu0 0.0
        %913 = vmatpush.msra.mxu0 0.0
        %914 = vmatpush.msra.mxu0 %v812
        %915 = vmatpush.msra.mxu0 %v811
        %916 = vmatpush.msra.mxu0 %v810
        %917 = vmatpush.msra.mxu0 %v809
        %918 = vmatmul.f32.gmra.mxu0 %v855
        %v919 = vpop.f32.mrf.mxu0
        %v920 = vadd.f32 0.0, %v919
        %921 = vmatmul.f32.gmra.mxu0 %v858
        %v922 = vpop.f32.mrf.mxu0
        %v923 = vadd.f32 0.0, %v922
        %924 = vmatmul.f32.gmra.mxu0 %v861
        %v925 = vpop.f32.mrf.mxu0
        %v926 = vadd.f32 0.0, %v925
        %927 = vmatmul.f32.gmra.mxu0 %v864
        %v928 = vpop.f32.mrf.mxu0
        %v929 = vadd.f32 0.0, %v928
        %930 = vmatmul.f32.gmra.mxu0 %v867
        %v931 = vpop.f32.mrf.mxu0
        %v932 = vadd.f32 0.0, %v931
        %933 = vmatmul.f32.gmra.mxu0 %v870
        %v934 = vpop.f32.mrf.mxu0
        %v935 = vadd.f32 0.0, %v934
        %936 = vmatmul.f32.gmra.mxu0 %v873
        %v937 = vpop.f32.mrf.mxu0
        %v938 = vadd.f32 0.0, %v937
        %939 = vmatmul.f32.gmra.mxu0 %v876
        %v940 = vpop.f32.mrf.mxu0
        %v941 = vadd.f32 0.0, %v940
        %942 = vmatmul.f32.gmra.mxu0 %v879
        %v943 = vpop.f32.mrf.mxu0
        %v944 = vadd.f32 0.0, %v943
        %945 = vmatmul.f32.gmra.mxu0 %v882
        %v946 = vpop.f32.mrf.mxu0
        %v947 = vadd.f32 0.0, %v946
        %948 = vmatmul.f32.gmra.mxu0 %v885
        %v949 = vpop.f32.mrf.mxu0
        %v950 = vadd.f32 0.0, %v949
        %951 = vmatmul.f32.gmra.mxu0 %v888
        %v952 = vpop.f32.mrf.mxu0
        %v953 = vadd.f32 0.0, %v952
        %954 = vmatmul.f32.gmra.mxu0 %v891
        %v955 = vpop.f32.mrf.mxu0
        %v956 = vadd.f32 0.0, %v955
        %957 = vmatmul.f32.gmra.mxu0 %v894
        %v958 = vpop.f32.mrf.mxu0
        %v959 = vadd.f32 0.0, %v958
        %960 = vmatmul.f32.gmra.mxu0 %v897
        %v961 = vpop.f32.mrf.mxu0
        %v962 = vadd.f32 0.0, %v961
        %963 = vmatmul.f32.gmra.mxu0 %v900
        %v964 = vpop.f32.mrf.mxu0
        %v965 = vadd.f32 0.0, %v964
        %966 = vdwg.mxu0
        %v968 = vsel %vm853, %v821, 0
        %v971 = vsel %vm853, %v822, 0
        %v974 = vsel %vm853, %v823, 0
        %v977 = vsel %vm853, %v824, 0
        %v980 = vsel %vm853, %v825, 0
        %v983 = vsel %vm853, %v826, 0
        %v986 = vsel %vm853, %v827, 0
        %v989 = vsel %vm853, %v828, 0
        %v992 = vsel %vm853, %v829, 0
        %v995 = vsel %vm853, %v830, 0
        %v998 = vsel %vm853, %v831, 0
        %v1001 = vsel %vm853, %v832, 0
        %v1004 = vsel %vm853, %v833, 0
        %v1007 = vsel %vm853, %v834, 0
        %v1010 = vsel %vm853, %v835, 0
        %v1013 = vsel %vm853, %v836, 0
        %1015 = vmatpush.msra.mxu0 0.0
        %1016 = vmatpush.msra.mxu0 0.0
        %1017 = vmatpush.msra.mxu0 0.0
        %1018 = vmatpush.msra.mxu0 0.0
        %1019 = vmatpush.msra.mxu0 0.0
        %1020 = vmatpush.msra.mxu0 0.0
        %1021 = vmatpush.msra.mxu0 0.0
        %1022 = vmatpush.msra.mxu0 0.0
        %1023 = vmatpush.msra.mxu0 0.0
        %1024 = vmatpush.msra.mxu0 0.0
        %1025 = vmatpush.msra.mxu0 0.0
        %1026 = vmatpush.msra.mxu0 0.0
        %1027 = vmatpush.msra.mxu0 %v804
        %1028 = vmatpush.msra.mxu0 %v803
        %1029 = vmatpush.msra.mxu0 %v802
        %1030 = vmatpush.msra.mxu0 %v801
        %1031 = vmatmul.f32.gmra.mxu0 %v968
        %v1032 = vpop.f32.mrf.mxu0
        %v1033 = vadd.f32 %v920, %v1032
        %1034 = vmatmul.f32.gmra.mxu0 %v971
        %v1035 = vpop.f32.mrf.mxu0
        %v1036 = vadd.f32 %v923, %v1035
        %1037 = vmatmul.f32.gmra.mxu0 %v974
        %v1038 = vpop.f32.mrf.mxu0
        %v1039 = vadd.f32 %v926, %v1038
        %1040 = vmatmul.f32.gmra.mxu0 %v977
        %v1041 = vpop.f32.mrf.mxu0
        %v1042 = vadd.f32 %v929, %v1041
        %1043 = vmatmul.f32.gmra.mxu0 %v980
        %v1044 = vpop.f32.mrf.mxu0
        %v1045 = vadd.f32 %v932, %v1044
        %1046 = vmatmul.f32.gmra.mxu0 %v983
        %v1047 = vpop.f32.mrf.mxu0
        %v1048 = vadd.f32 %v935, %v1047
        %1049 = vmatmul.f32.gmra.mxu0 %v986
        %v1050 = vpop.f32.mrf.mxu0
        %v1051 = vadd.f32 %v938, %v1050
        %1052 = vmatmul.f32.gmra.mxu0 %v989
        %v1053 = vpop.f32.mrf.mxu0
        %v1054 = vadd.f32 %v941, %v1053
        %1055 = vmatmul.f32.gmra.mxu0 %v992
        %v1056 = vpop.f32.mrf.mxu0
        %v1057 = vadd.f32 %v944, %v1056
        %1058 = vmatmul.f32.gmra.mxu0 %v995
        %v1059 = vpop.f32.mrf.mxu0
        %v1060 = vadd.f32 %v947, %v1059
        %1061 = vmatmul.f32.gmra.mxu0 %v998
        %v1062 = vpop.f32.mrf.mxu0
        %v1063 = vadd.f32 %v950, %v1062
        %1064 = vmatmul.f32.gmra.mxu0 %v1001
        %v1065 = vpop.f32.mrf.mxu0
        %v1066 = vadd.f32 %v953, %v1065
        %1067 = vmatmul.f32.gmra.mxu0 %v1004
        %v1068 = vpop.f32.mrf.mxu0
        %v1069 = vadd.f32 %v956, %v1068
        %1070 = vmatmul.f32.gmra.mxu0 %v1007
        %v1071 = vpop.f32.mrf.mxu0
        %v1072 = vadd.f32 %v959, %v1071
        %1073 = vmatmul.f32.gmra.mxu0 %v1010
        %v1074 = vpop.f32.mrf.mxu0
        %v1075 = vadd.f32 %v962, %v1074
        %1076 = vmatmul.f32.gmra.mxu0 %v1013
        %v1077 = vpop.f32.mrf.mxu0
        %v1078 = vadd.f32 %v965, %v1077
        %1079 = vdwg.mxu0
        %v1080 = vld [vmem:[%s8] sm:$0xff]
        %v1081 = vld [vmem:[%s8 + $0x8] sm:$0xff]
        %v1082 = vld [vmem:[%s8 + $0x10] sm:$0xff]
        %v1083 = vld [vmem:[%s8 + $0x18] sm:$0xff]
        %v1084 = vld [vmem:[%s8 + $0x20] sm:$0xff]
        %v1085 = vld [vmem:[%s8 + $0x28] sm:$0xff]
        %v1086 = vld [vmem:[%s8 + $0x30] sm:$0xff]
        %v1087 = vld [vmem:[%s8 + $0x38] sm:$0xff]
        %v1088 = vld [vmem:[%s8 + $0x40] sm:$0xff]
        %v1089 = vld [vmem:[%s8 + $0x48] sm:$0xff]
        %v1090 = vld [vmem:[%s8 + $0x50] sm:$0xff]
        %v1091 = vld [vmem:[%s8 + $0x58] sm:$0xff]
        %v1092 = vld [vmem:[%s8 + $0x60] sm:$0xff]
        %v1093 = vld [vmem:[%s8 + $0x68] sm:$0xff]
        %v1094 = vld [vmem:[%s8 + $0x70] sm:$0xff]
        %v1095 = vld [vmem:[%s8 + $0x78] sm:$0xff]
        %1097 = vset.pattern.permute.xlu0 0
        %1098 = vperm.xlu0 %1097, %v1080
        %v1099 = vpop.permute.xlu0 %1098
        %1102 = vset.pattern.permute.xlu0 0
        %1103 = vperm.xlu0 %1102, %v1081
        %v1104 = vpop.permute.xlu0 %1103
        %1107 = vset.pattern.permute.xlu0 0
        %1108 = vperm.xlu0 %1107, %v1082
        %v1109 = vpop.permute.xlu0 %1108
        %1112 = vset.pattern.permute.xlu0 0
        %1113 = vperm.xlu0 %1112, %v1083
        %v1114 = vpop.permute.xlu0 %1113
        %1117 = vset.pattern.permute.xlu0 0
        %1118 = vperm.xlu0 %1117, %v1084
        %v1119 = vpop.permute.xlu0 %1118
        %1122 = vset.pattern.permute.xlu0 0
        %1123 = vperm.xlu0 %1122, %v1085
        %v1124 = vpop.permute.xlu0 %1123
        %1127 = vset.pattern.permute.xlu0 0
        %1128 = vperm.xlu0 %1127, %v1086
        %v1129 = vpop.permute.xlu0 %1128
        %1132 = vset.pattern.permute.xlu0 0
        %1133 = vperm.xlu0 %1132, %v1087
        %v1134 = vpop.permute.xlu0 %1133
        %1137 = vset.pattern.permute.xlu0 0
        %1138 = vperm.xlu0 %1137, %v1088
        %v1139 = vpop.permute.xlu0 %1138
        %1142 = vset.pattern.permute.xlu0 0
        %1143 = vperm.xlu0 %1142, %v1089
        %v1144 = vpop.permute.xlu0 %1143
        %1147 = vset.pattern.permute.xlu0 0
        %1148 = vperm.xlu0 %1147, %v1090
        %v1149 = vpop.permute.xlu0 %1148
        %1152 = vset.pattern.permute.xlu0 0
        %1153 = vperm.xlu0 %1152, %v1091
        %v1154 = vpop.permute.xlu0 %1153
        %1157 = vset.pattern.permute.xlu0 0
        %1158 = vperm.xlu0 %1157, %v1092
        %v1159 = vpop.permute.xlu0 %1158
        %1162 = vset.pattern.permute.xlu0 0
        %1163 = vperm.xlu0 %1162, %v1093
        %v1164 = vpop.permute.xlu0 %1163
        %1167 = vset.pattern.permute.xlu0 0
        %1168 = vperm.xlu0 %1167, %v1094
        %v1169 = vpop.permute.xlu0 %1168
        %1172 = vset.pattern.permute.xlu0 0
        %1173 = vperm.xlu0 %1172, %v1095
        %v1174 = vpop.permute.xlu0 %1173
        %v1176 = vadd.f32 %v1033, %v1099
        %v1177 = vadd.f32 %v1036, %v1104
        %v1178 = vadd.f32 %v1039, %v1109
        %v1179 = vadd.f32 %v1042, %v1114
        %v1180 = vadd.f32 %v1045, %v1119
        %v1181 = vadd.f32 %v1048, %v1124
        %v1182 = vadd.f32 %v1051, %v1129
        %v1183 = vadd.f32 %v1054, %v1134
        %v1184 = vadd.f32 %v1057, %v1139
        %v1185 = vadd.f32 %v1060, %v1144
        %v1186 = vadd.f32 %v1063, %v1149
        %v1187 = vadd.f32 %v1066, %v1154
        %v1188 = vadd.f32 %v1069, %v1159
        %v1189 = vadd.f32 %v1072, %v1164
        %v1190 = vadd.f32 %v1075, %v1169
        %v1191 = vadd.f32 %v1078, %v1174
        %v1192 = vpack.c.bf16 %v1176, %v1176
        %v1193 = vpack.c.bf16 %v1177, %v1177
        %v1194 = vpack.c.bf16 %v1178, %v1178
        %v1195 = vpack.c.bf16 %v1179, %v1179
        %v1196 = vpack.c.bf16 %v1180, %v1180
        %v1197 = vpack.c.bf16 %v1181, %v1181
        %v1198 = vpack.c.bf16 %v1182, %v1182
        %v1199 = vpack.c.bf16 %v1183, %v1183
        %v1200 = vpack.c.bf16 %v1184, %v1184
        %v1201 = vpack.c.bf16 %v1185, %v1185
        %v1202 = vpack.c.bf16 %v1186, %v1186
        %v1203 = vpack.c.bf16 %v1187, %v1187
        %v1204 = vpack.c.bf16 %v1188, %v1188
        %v1205 = vpack.c.bf16 %v1189, %v1189
        %v1206 = vpack.c.bf16 %v1190, %v1190
        %v1207 = vpack.c.bf16 %v1191, %v1191
        %v1208 = vunpack.c.l.bf16 %v1192
        %v1209 = vunpack.c.l.bf16 %v1193
        %v1210 = vunpack.c.l.bf16 %v1194
        %v1211 = vunpack.c.l.bf16 %v1195
        %v1212 = vmul.f32 %v1208, 0.5
        %v1213 = vmul.f32 %v1209, 0.5
        %v1214 = vmul.f32 %v1210, 0.5
        %v1215 = vmul.f32 %v1211, 0.5
        %v1216 = vpack.c.bf16 %v1212, %v1212
        %v1217 = vpack.c.bf16 %v1213, %v1213
        %v1218 = vpack.c.bf16 %v1214, %v1214
        %v1219 = vpack.c.bf16 %v1215, %v1215
        %v1220 = vunpack.c.l.bf16 %v1216
        %v1221 = vunpack.c.l.bf16 %v1217
        %v1222 = vunpack.c.l.bf16 %v1218
        %v1223 = vunpack.c.l.bf16 %v1219
        %v1224 = vtanh.pop %v1220
        %v1225 = vtanh.pop %v1221
        %v1226 = vtanh.pop %v1222
        %v1227 = vtanh.pop %v1223
        %v1228 = vpack.c.bf16 %v1224, %v1224
        %v1229 = vpack.c.bf16 %v1225, %v1225
        %v1230 = vpack.c.bf16 %v1226, %v1226
        %v1231 = vpack.c.bf16 %v1227, %v1227
        %v1232 = vunpack.c.l.bf16 %v1228
        %v1233 = vunpack.c.l.bf16 %v1229
        %v1234 = vunpack.c.l.bf16 %v1230
        %v1235 = vunpack.c.l.bf16 %v1231
        %v1236 = vmul.f32 %v1232, 0.5
        %v1237 = vmul.f32 %v1233, 0.5
        %v1238 = vmul.f32 %v1234, 0.5
        %v1239 = vmul.f32 %v1235, 0.5
        %v1240 = vpack.c.bf16 %v1236, %v1236
        %v1241 = vpack.c.bf16 %v1237, %v1237
        %v1242 = vpack.c.bf16 %v1238, %v1238
        %v1243 = vpack.c.bf16 %v1239, %v1239
        %v1244 = vunpack.c.l.bf16 %v1240
        %v1245 = vunpack.c.l.bf16 %v1241
        %v1246 = vunpack.c.l.bf16 %v1242
        %v1247 = vunpack.c.l.bf16 %v1243
        %v1248 = vadd.f32 %v1244, 0.5
        %v1249 = vadd.f32 %v1245, 0.5
        %v1250 = vadd.f32 %v1246, 0.5
        %v1251 = vadd.f32 %v1247, 0.5
        %v1252 = vpack.c.bf16 %v1248, %v1248
        %v1253 = vpack.c.bf16 %v1249, %v1249
        %v1254 = vpack.c.bf16 %v1250, %v1250
        %v1255 = vpack.c.bf16 %v1251, %v1251
        %v1256 = vunpack.c.l.bf16 %v1196
        %v1257 = vunpack.c.l.bf16 %v1197
        %v1258 = vunpack.c.l.bf16 %v1198
        %v1259 = vunpack.c.l.bf16 %v1199
        %v1260 = vmul.f32 %v1256, 0.5
        %v1261 = vmul.f32 %v1257, 0.5
        %v1262 = vmul.f32 %v1258, 0.5
        %v1263 = vmul.f32 %v1259, 0.5
        %v1264 = vpack.c.bf16 %v1260, %v1260
        %v1265 = vpack.c.bf16 %v1261, %v1261
        %v1266 = vpack.c.bf16 %v1262, %v1262
        %v1267 = vpack.c.bf16 %v1263, %v1263
        %v1268 = vunpack.c.l.bf16 %v1264
        %v1269 = vunpack.c.l.bf16 %v1265
        %v1270 = vunpack.c.l.bf16 %v1266
        %v1271 = vunpack.c.l.bf16 %v1267
        %v1272 = vtanh.pop %v1268
        %v1273 = vtanh.pop %v1269
        %v1274 = vtanh.pop %v1270
        %v1275 = vtanh.pop %v1271
        %v1276 = vpack.c.bf16 %v1272, %v1272
        %v1277 = vpack.c.bf16 %v1273, %v1273
        %v1278 = vpack.c.bf16 %v1274, %v1274
        %v1279 = vpack.c.bf16 %v1275, %v1275
        %v1280 = vunpack.c.l.bf16 %v1276
        %v1281 = vunpack.c.l.bf16 %v1277
        %v1282 = vunpack.c.l.bf16 %v1278
        %v1283 = vunpack.c.l.bf16 %v1279
        %v1284 = vmul.f32 %v1280, 0.5
        %v1285 = vmul.f32 %v1281, 0.5
        %v1286 = vmul.f32 %v1282, 0.5
        %v1287 = vmul.f32 %v1283, 0.5
        %v1288 = vpack.c.bf16 %v1284, %v1284
        %v1289 = vpack.c.bf16 %v1285, %v1285
        %v1290 = vpack.c.bf16 %v1286, %v1286
        %v1291 = vpack.c.bf16 %v1287, %v1287
        %v1292 = vunpack.c.l.bf16 %v1288
        %v1293 = vunpack.c.l.bf16 %v1289
        %v1294 = vunpack.c.l.bf16 %v1290
        %v1295 = vunpack.c.l.bf16 %v1291
        %v1296 = vadd.f32 %v1292, 0.5
        %v1297 = vadd.f32 %v1293, 0.5
        %v1298 = vadd.f32 %v1294, 0.5
        %v1299 = vadd.f32 %v1295, 0.5
        %v1300 = vpack.c.bf16 %v1296, %v1296
        %v1301 = vpack.c.bf16 %v1297, %v1297
        %v1302 = vpack.c.bf16 %v1298, %v1298
        %v1303 = vpack.c.bf16 %v1299, %v1299
        %v1304 = vunpack.c.l.bf16 %v1200
        %v1305 = vunpack.c.l.bf16 %v1201
        %v1306 = vunpack.c.l.bf16 %v1202
        %v1307 = vunpack.c.l.bf16 %v1203
        %v1308 = vtanh.pop %v1304
        %v1309 = vtanh.pop %v1305
        %v1310 = vtanh.pop %v1306
        %v1311 = vtanh.pop %v1307
        %v1312 = vpack.c.bf16 %v1308, %v1308
        %v1313 = vpack.c.bf16 %v1309, %v1309
        %v1314 = vpack.c.bf16 %v1310, %v1310
        %v1315 = vpack.c.bf16 %v1311, %v1311
        %v1316 = vunpack.c.l.bf16 %v1204
        %v1317 = vunpack.c.l.bf16 %v1205
        %v1318 = vunpack.c.l.bf16 %v1206
        %v1319 = vunpack.c.l.bf16 %v1207
        %v1320 = vmul.f32 %v1316, 0.5
        %v1321 = vmul.f32 %v1317, 0.5
        %v1322 = vmul.f32 %v1318, 0.5
        %v1323 = vmul.f32 %v1319, 0.5
        %v1324 = vpack.c.bf16 %v1320, %v1320
        %v1325 = vpack.c.bf16 %v1321, %v1321
        %v1326 = vpack.c.bf16 %v1322, %v1322
        %v1327 = vpack.c.bf16 %v1323, %v1323
        %v1328 = vunpack.c.l.bf16 %v1324
        %v1329 = vunpack.c.l.bf16 %v1325
        %v1330 = vunpack.c.l.bf16 %v1326
        %v1331 = vunpack.c.l.bf16 %v1327
        %v1332 = vtanh.pop %v1328
        %v1333 = vtanh.pop %v1329
        %v1334 = vtanh.pop %v1330
        %v1335 = vtanh.pop %v1331
        %v1336 = vpack.c.bf16 %v1332, %v1332
        %v1337 = vpack.c.bf16 %v1333, %v1333
        %v1338 = vpack.c.bf16 %v1334, %v1334
        %v1339 = vpack.c.bf16 %v1335, %v1335
        %v1340 = vunpack.c.l.bf16 %v1336
        %v1341 = vunpack.c.l.bf16 %v1337
        %v1342 = vunpack.c.l.bf16 %v1338
        %v1343 = vunpack.c.l.bf16 %v1339
        %v1344 = vmul.f32 %v1340, 0.5
        %v1345 = vmul.f32 %v1341, 0.5
        %v1346 = vmul.f32 %v1342, 0.5
        %v1347 = vmul.f32 %v1343, 0.5
        %v1348 = vpack.c.bf16 %v1344, %v1344
        %v1349 = vpack.c.bf16 %v1345, %v1345
        %v1350 = vpack.c.bf16 %v1346, %v1346
        %v1351 = vpack.c.bf16 %v1347, %v1347
        %v1352 = vunpack.c.l.bf16 %v1348
        %v1353 = vunpack.c.l.bf16 %v1349
        %v1354 = vunpack.c.l.bf16 %v1350
        %v1355 = vunpack.c.l.bf16 %v1351
        %v1356 = vadd.f32 %v1352, 0.5
        %v1357 = vadd.f32 %v1353, 0.5
        %v1358 = vadd.f32 %v1354, 0.5
        %v1359 = vadd.f32 %v1355, 0.5
        %v1360 = vpack.c.bf16 %v1356, %v1356
        %v1361 = vpack.c.bf16 %v1357, %v1357
        %v1362 = vpack.c.bf16 %v1358, %v1358
        %v1363 = vpack.c.bf16 %v1359, %v1359
        %v1364 = vunpack.c.l.bf16 %v1300
        %v1365 = vunpack.c.l.bf16 %v1301
        %v1366 = vunpack.c.l.bf16 %v1302
        %v1367 = vunpack.c.l.bf16 %v1303
        %v1368 = vmul.f32 %v1364, %v817
        %v1369 = vmul.f32 %v1365, %v818
        %v1370 = vmul.f32 %v1366, %v819
        %v1371 = vmul.f32 %v1367, %v820
        %v1372 = vunpack.c.l.bf16 %v1252
        %v1373 = vunpack.c.l.bf16 %v1253
        %v1374 = vunpack.c.l.bf16 %v1254
        %v1375 = vunpack.c.l.bf16 %v1255
        %v1376 = vunpack.c.l.bf16 %v1312
        %v1377 = vunpack.c.l.bf16 %v1313
        %v1378 = vunpack.c.l.bf16 %v1314
        %v1379 = vunpack.c.l.bf16 %v1315
        %v1380 = vmul.f32 %v1372, %v1376
        %v1381 = vmul.f32 %v1373, %v1377
        %v1382 = vmul.f32 %v1374, %v1378
        %v1383 = vmul.f32 %v1375, %v1379
        %v1384 = vadd.f32 %v1368, %v1380
        %v1385 = vadd.f32 %v1369, %v1381
        %v1386 = vadd.f32 %v1370, %v1382
        %v1387 = vadd.f32 %v1371, %v1383
        %v1388 = vunpack.c.l.bf16 %v1360
        %v1389 = vunpack.c.l.bf16 %v1361
        %v1390 = vunpack.c.l.bf16 %v1362
        %v1391 = vunpack.c.l.bf16 %v1363
        %v1392 = vpack.c.bf16 %v1384, %v1384
        %v1393 = vpack.c.bf16 %v1385, %v1385
        %v1394 = vpack.c.bf16 %v1386, %v1386
        %v1395 = vpack.c.bf16 %v1387, %v1387
        %v1396 = vunpack.c.l.bf16 %v1392
        %v1397 = vunpack.c.l.bf16 %v1393
        %v1398 = vunpack.c.l.bf16 %v1394
        %v1399 = vunpack.c.l.bf16 %v1395
        %v1400 = vtanh.pop %v1396
        %v1401 = vtanh.pop %v1397
        %v1402 = vtanh.pop %v1398
        %v1403 = vtanh.pop %v1399
        %v1404 = vpack.c.bf16 %v1400, %v1400
        %v1405 = vpack.c.bf16 %v1401, %v1401
        %v1406 = vpack.c.bf16 %v1402, %v1402
        %v1407 = vpack.c.bf16 %v1403, %v1403
        %v1408 = vunpack.c.l.bf16 %v1404
        %v1409 = vunpack.c.l.bf16 %v1405
        %v1410 = vunpack.c.l.bf16 %v1406
        %v1411 = vunpack.c.l.bf16 %v1407
        %v1412 = vmul.f32 %v1388, %v1408
        %v1413 = vmul.f32 %v1389, %v1409
        %v1414 = vmul.f32 %v1390, %v1410
        %v1415 = vmul.f32 %v1391, %v1411
        %v1416 = vpack.c.bf16 %v1412, %v1412
        %v1417 = vpack.c.bf16 %v1413, %v1413
        %v1418 = vpack.c.bf16 %v1414, %v1414
        %v1419 = vpack.c.bf16 %v1415, %v1415
        %1420 = vst [vmem:[%s573] sm:$0xf] %v1416
        %1421 = vst [vmem:[%s573 + $0x4] sm:$0xf] %v1417
        %1422 = vst [vmem:[%s573 + $0x8] sm:$0xf] %v1418
        %1423 = vst [vmem:[%s573 + $0xc] sm:$0xf] %v1419
        %1424 = vst [vmem:[%s573 + $0x20] sm:$0xf] %v1392
        %1425 = vst [vmem:[%s573 + $0x24] sm:$0xf] %v1393
        %1426 = vst [vmem:[%s573 + $0x28] sm:$0xf] %v1394
        %1427 = vst [vmem:[%s573 + $0x2c] sm:$0xf] %v1395
        %v1428 = vld [vmem:[%s517 + $0x10] sm:$0xf]
        %v1429 = vld [vmem:[%s517 + $0x14] sm:$0xf]
        %v1430 = vld [vmem:[%s517 + $0x18] sm:$0xf]
        %v1431 = vld [vmem:[%s517 + $0x1c] sm:$0xf]
        %v1432 = vunpack.c.l.bf16 %v1428
        %v1433 = vunpack.c.l.bf16 %v1429
        %v1434 = vunpack.c.l.bf16 %v1430
        %v1435 = vunpack.c.l.bf16 %v1431
        %v1436 = vld [vmem:[%s517 + $0x30] sm:$0xf]
        %v1437 = vld [vmem:[%s517 + $0x34] sm:$0xf]
        %v1438 = vld [vmem:[%s517 + $0x38] sm:$0xf]
        %v1439 = vld [vmem:[%s517 + $0x3c] sm:$0xf]
        %v1440 = vunpack.c.l.bf16 %v1436
        %v1441 = vunpack.c.l.bf16 %v1437
        %v1442 = vunpack.c.l.bf16 %v1438
        %v1443 = vunpack.c.l.bf16 %v1439
        %s1444 = scalar_lea.vmem %s6, 128
        %v1445 = vld [vmem:[%s1444] sm:$0xff]
        %v1446 = vld [vmem:[%s1444 + $0x8] sm:$0xff]
        %v1447 = vld [vmem:[%s1444 + $0x10] sm:$0xff]
        %v1448 = vld [vmem:[%s1444 + $0x18] sm:$0xff]
        %v1449 = vld [vmem:[%s1444 + $0x20] sm:$0xff]
        %v1450 = vld [vmem:[%s1444 + $0x28] sm:$0xff]
        %v1451 = vld [vmem:[%s1444 + $0x30] sm:$0xff]
        %v1452 = vld [vmem:[%s1444 + $0x38] sm:$0xff]
        %v1453 = vld [vmem:[%s1444 + $0x40] sm:$0xff]
        %v1454 = vld [vmem:[%s1444 + $0x48] sm:$0xff]
        %v1455 = vld [vmem:[%s1444 + $0x50] sm:$0xff]
        %v1456 = vld [vmem:[%s1444 + $0x58] sm:$0xff]
        %v1457 = vld [vmem:[%s1444 + $0x60] sm:$0xff]
        %v1458 = vld [vmem:[%s1444 + $0x68] sm:$0xff]
        %v1459 = vld [vmem:[%s1444 + $0x70] sm:$0xff]
        %v1460 = vld [vmem:[%s1444 + $0x78] sm:$0xff]
        %s1461 = scalar_lea.vmem %s7, 128
        %v1462 = vld [vmem:[%s1461] sm:$0xff]
        %v1463 = vld [vmem:[%s1461 + $0x8] sm:$0xff]
        %v1464 = vld [vmem:[%s1461 + $0x10] sm:$0xff]
        %v1465 = vld [vmem:[%s1461 + $0x18] sm:$0xff]
        %v1466 = vld [vmem:[%s1461 + $0x20] sm:$0xff]
        %v1467 = vld [vmem:[%s1461 + $0x28] sm:$0xff]
        %v1468 = vld [vmem:[%s1461 + $0x30] sm:$0xff]
        %v1469 = vld [vmem:[%s1461 + $0x38] sm:$0xff]
        %v1470 = vld [vmem:[%s1461 + $0x40] sm:$0xff]
        %v1471 = vld [vmem:[%s1461 + $0x48] sm:$0xff]
        %v1472 = vld [vmem:[%s1461 + $0x50] sm:$0xff]
        %v1473 = vld [vmem:[%s1461 + $0x58] sm:$0xff]
        %v1474 = vld [vmem:[%s1461 + $0x60] sm:$0xff]
        %v1475 = vld [vmem:[%s1461 + $0x68] sm:$0xff]
        %v1476 = vld [vmem:[%s1461 + $0x70] sm:$0xff]
        %v1477 = vld [vmem:[%s1461 + $0x78] sm:$0xff]
        %v1479 = vsel %vm853, %v1462, 0
        %v1482 = vsel %vm853, %v1463, 0
        %v1485 = vsel %vm853, %v1464, 0
        %v1488 = vsel %vm853, %v1465, 0
        %v1491 = vsel %vm853, %v1466, 0
        %v1494 = vsel %vm853, %v1467, 0
        %v1497 = vsel %vm853, %v1468, 0
        %v1500 = vsel %vm853, %v1469, 0
        %v1503 = vsel %vm853, %v1470, 0
        %v1506 = vsel %vm853, %v1471, 0
        %v1509 = vsel %vm853, %v1472, 0
        %v1512 = vsel %vm853, %v1473, 0
        %v1515 = vsel %vm853, %v1474, 0
        %v1518 = vsel %vm853, %v1475, 0
        %v1521 = vsel %vm853, %v1476, 0
        %v1524 = vsel %vm853, %v1477, 0
        %1526 = vmatpush.msra.mxu0 0.0
        %1527 = vmatpush.msra.mxu0 0.0
        %1528 = vmatpush.msra.mxu0 0.0
        %1529 = vmatpush.msra.mxu0 0.0
        %1530 = vmatpush.msra.mxu0 0.0
        %1531 = vmatpush.msra.mxu0 0.0
        %1532 = vmatpush.msra.mxu0 0.0
        %1533 = vmatpush.msra.mxu0 0.0
        %1534 = vmatpush.msra.mxu0 0.0
        %1535 = vmatpush.msra.mxu0 0.0
        %1536 = vmatpush.msra.mxu0 0.0
        %1537 = vmatpush.msra.mxu0 0.0
        %1538 = vmatpush.msra.mxu0 %v1435
        %1539 = vmatpush.msra.mxu0 %v1434
        %1540 = vmatpush.msra.mxu0 %v1433
        %1541 = vmatpush.msra.mxu0 %v1432
        %1542 = vmatmul.f32.gmra.mxu0 %v1479
        %v1543 = vpop.f32.mrf.mxu0
        %v1544 = vadd.f32 0.0, %v1543
        %1545 = vmatmul.f32.gmra.mxu0 %v1482
        %v1546 = vpop.f32.mrf.mxu0
        %v1547 = vadd.f32 0.0, %v1546
        %1548 = vmatmul.f32.gmra.mxu0 %v1485
        %v1549 = vpop.f32.mrf.mxu0
        %v1550 = vadd.f32 0.0, %v1549
        %1551 = vmatmul.f32.gmra.mxu0 %v1488
        %v1552 = vpop.f32.mrf.mxu0
        %v1553 = vadd.f32 0.0, %v1552
        %1554 = vmatmul.f32.gmra.mxu0 %v1491
        %v1555 = vpop.f32.mrf.mxu0
        %v1556 = vadd.f32 0.0, %v1555
        %1557 = vmatmul.f32.gmra.mxu0 %v1494
        %v1558 = vpop.f32.mrf.mxu0
        %v1559 = vadd.f32 0.0, %v1558
        %1560 = vmatmul.f32.gmra.mxu0 %v1497
        %v1561 = vpop.f32.mrf.mxu0
        %v1562 = vadd.f32 0.0, %v1561
        %1563 = vmatmul.f32.gmra.mxu0 %v1500
        %v1564 = vpop.f32.mrf.mxu0
        %v1565 = vadd.f32 0.0, %v1564
        %1566 = vmatmul.f32.gmra.mxu0 %v1503
        %v1567 = vpop.f32.mrf.mxu0
        %v1568 = vadd.f32 0.0, %v1567
        %1569 = vmatmul.f32.gmra.mxu0 %v1506
        %v1570 = vpop.f32.mrf.mxu0
        %v1571 = vadd.f32 0.0, %v1570
        %1572 = vmatmul.f32.gmra.mxu0 %v1509
        %v1573 = vpop.f32.mrf.mxu0
        %v1574 = vadd.f32 0.0, %v1573
        %1575 = vmatmul.f32.gmra.mxu0 %v1512
        %v1576 = vpop.f32.mrf.mxu0
        %v1577 = vadd.f32 0.0, %v1576
        %1578 = vmatmul.f32.gmra.mxu0 %v1515
        %v1579 = vpop.f32.mrf.mxu0
        %v1580 = vadd.f32 0.0, %v1579
        %1581 = vmatmul.f32.gmra.mxu0 %v1518
        %v1582 = vpop.f32.mrf.mxu0
        %v1583 = vadd.f32 0.0, %v1582
        %1584 = vmatmul.f32.gmra.mxu0 %v1521
        %v1585 = vpop.f32.mrf.mxu0
        %v1586 = vadd.f32 0.0, %v1585
        %1587 = vmatmul.f32.gmra.mxu0 %v1524
        %v1588 = vpop.f32.mrf.mxu0
        %v1589 = vadd.f32 0.0, %v1588
        %1590 = vdwg.mxu0
        %v1592 = vsel %vm853, %v1445, 0
        %v1595 = vsel %vm853, %v1446, 0
        %v1598 = vsel %vm853, %v1447, 0
        %v1601 = vsel %vm853, %v1448, 0
        %v1604 = vsel %vm853, %v1449, 0
        %v1607 = vsel %vm853, %v1450, 0
        %v1610 = vsel %vm853, %v1451, 0
        %v1613 = vsel %vm853, %v1452, 0
        %v1616 = vsel %vm853, %v1453, 0
        %v1619 = vsel %vm853, %v1454, 0
        %v1622 = vsel %vm853, %v1455, 0
        %v1625 = vsel %vm853, %v1456, 0
        %v1628 = vsel %vm853, %v1457, 0
        %v1631 = vsel %vm853, %v1458, 0
        %v1634 = vsel %vm853, %v1459, 0
        %v1637 = vsel %vm853, %v1460, 0
        %1639 = vmatpush.msra.mxu0 0.0
        %1640 = vmatpush.msra.mxu0 0.0
        %1641 = vmatpush.msra.mxu0 0.0
        %1642 = vmatpush.msra.mxu0 0.0
        %1643 = vmatpush.msra.mxu0 0.0
        %1644 = vmatpush.msra.mxu0 0.0
        %1645 = vmatpush.msra.mxu0 0.0
        %1646 = vmatpush.msra.mxu0 0.0
        %1647 = vmatpush.msra.mxu0 0.0
        %1648 = vmatpush.msra.mxu0 0.0
        %1649 = vmatpush.msra.mxu0 0.0
        %1650 = vmatpush.msra.mxu0 0.0
        %1651 = vmatpush.msra.mxu0 %v1415
        %1652 = vmatpush.msra.mxu0 %v1414
        %1653 = vmatpush.msra.mxu0 %v1413
        %1654 = vmatpush.msra.mxu0 %v1412
        %1655 = vmatmul.f32.gmra.mxu0 %v1592
        %v1656 = vpop.f32.mrf.mxu0
        %v1657 = vadd.f32 %v1544, %v1656
        %1658 = vmatmul.f32.gmra.mxu0 %v1595
        %v1659 = vpop.f32.mrf.mxu0
        %v1660 = vadd.f32 %v1547, %v1659
        %1661 = vmatmul.f32.gmra.mxu0 %v1598
        %v1662 = vpop.f32.mrf.mxu0
        %v1663 = vadd.f32 %v1550, %v1662
        %1664 = vmatmul.f32.gmra.mxu0 %v1601
        %v1665 = vpop.f32.mrf.mxu0
        %v1666 = vadd.f32 %v1553, %v1665
        %1667 = vmatmul.f32.gmra.mxu0 %v1604
        %v1668 = vpop.f32.mrf.mxu0
        %v1669 = vadd.f32 %v1556, %v1668
        %1670 = vmatmul.f32.gmra.mxu0 %v1607
        %v1671 = vpop.f32.mrf.mxu0
        %v1672 = vadd.f32 %v1559, %v1671
        %1673 = vmatmul.f32.gmra.mxu0 %v1610
        %v1674 = vpop.f32.mrf.mxu0
        %v1675 = vadd.f32 %v1562, %v1674
        %1676 = vmatmul.f32.gmra.mxu0 %v1613
        %v1677 = vpop.f32.mrf.mxu0
        %v1678 = vadd.f32 %v1565, %v1677
        %1679 = vmatmul.f32.gmra.mxu0 %v1616
        %v1680 = vpop.f32.mrf.mxu0
        %v1681 = vadd.f32 %v1568, %v1680
        %1682 = vmatmul.f32.gmra.mxu0 %v1619
        %v1683 = vpop.f32.mrf.mxu0
        %v1684 = vadd.f32 %v1571, %v1683
        %1685 = vmatmul.f32.gmra.mxu0 %v1622
        %v1686 = vpop.f32.mrf.mxu0
        %v1687 = vadd.f32 %v1574, %v1686
        %1688 = vmatmul.f32.gmra.mxu0 %v1625
        %v1689 = vpop.f32.mrf.mxu0
        %v1690 = vadd.f32 %v1577, %v1689
        %1691 = vmatmul.f32.gmra.mxu0 %v1628
        %v1692 = vpop.f32.mrf.mxu0
        %v1693 = vadd.f32 %v1580, %v1692
        %1694 = vmatmul.f32.gmra.mxu0 %v1631
        %v1695 = vpop.f32.mrf.mxu0
        %v1696 = vadd.f32 %v1583, %v1695
        %1697 = vmatmul.f32.gmra.mxu0 %v1634
        %v1698 = vpop.f32.mrf.mxu0
        %v1699 = vadd.f32 %v1586, %v1698
        %1700 = vmatmul.f32.gmra.mxu0 %v1637
        %v1701 = vpop.f32.mrf.mxu0
        %v1702 = vadd.f32 %v1589, %v1701
        %1703 = vdwg.mxu0
        %s1704 = scalar_lea.vmem %s8, 128
        %v1705 = vld [vmem:[%s1704] sm:$0xff]
        %v1706 = vld [vmem:[%s1704 + $0x8] sm:$0xff]
        %v1707 = vld [vmem:[%s1704 + $0x10] sm:$0xff]
        %v1708 = vld [vmem:[%s1704 + $0x18] sm:$0xff]
        %v1709 = vld [vmem:[%s1704 + $0x20] sm:$0xff]
        %v1710 = vld [vmem:[%s1704 + $0x28] sm:$0xff]
        %v1711 = vld [vmem:[%s1704 + $0x30] sm:$0xff]
        %v1712 = vld [vmem:[%s1704 + $0x38] sm:$0xff]
        %v1713 = vld [vmem:[%s1704 + $0x40] sm:$0xff]
        %v1714 = vld [vmem:[%s1704 + $0x48] sm:$0xff]
        %v1715 = vld [vmem:[%s1704 + $0x50] sm:$0xff]
        %v1716 = vld [vmem:[%s1704 + $0x58] sm:$0xff]
        %v1717 = vld [vmem:[%s1704 + $0x60] sm:$0xff]
        %v1718 = vld [vmem:[%s1704 + $0x68] sm:$0xff]
        %v1719 = vld [vmem:[%s1704 + $0x70] sm:$0xff]
        %v1720 = vld [vmem:[%s1704 + $0x78] sm:$0xff]
        %1722 = vset.pattern.permute.xlu0 0
        %1723 = vperm.xlu0 %1722, %v1705
        %v1724 = vpop.permute.xlu0 %1723
        %1727 = vset.pattern.permute.xlu0 0
        %1728 = vperm.xlu0 %1727, %v1706
        %v1729 = vpop.permute.xlu0 %1728
        %1732 = vset.pattern.permute.xlu0 0
        %1733 = vperm.xlu0 %1732, %v1707
        %v1734 = vpop.permute.xlu0 %1733
        %1737 = vset.pattern.permute.xlu0 0
        %1738 = vperm.xlu0 %1737, %v1708
        %v1739 = vpop.permute.xlu0 %1738
        %1742 = vset.pattern.permute.xlu0 0
        %1743 = vperm.xlu0 %1742, %v1709
        %v1744 = vpop.permute.xlu0 %1743
        %1747 = vset.pattern.permute.xlu0 0
        %1748 = vperm.xlu0 %1747, %v1710
        %v1749 = vpop.permute.xlu0 %1748
        %1752 = vset.pattern.permute.xlu0 0
        %1753 = vperm.xlu0 %1752, %v1711
        %v1754 = vpop.permute.xlu0 %1753
        %1757 = vset.pattern.permute.xlu0 0
        %1758 = vperm.xlu0 %1757, %v1712
        %v1759 = vpop.permute.xlu0 %1758
        %1762 = vset.pattern.permute.xlu0 0
        %1763 = vperm.xlu0 %1762, %v1713
        %v1764 = vpop.permute.xlu0 %1763
        %1767 = vset.pattern.permute.xlu0 0
        %1768 = vperm.xlu0 %1767, %v1714
        %v1769 = vpop.permute.xlu0 %1768
        %1772 = vset.pattern.permute.xlu0 0
        %1773 = vperm.xlu0 %1772, %v1715
        %v1774 = vpop.permute.xlu0 %1773
        %1777 = vset.pattern.permute.xlu0 0
        %1778 = vperm.xlu0 %1777, %v1716
        %v1779 = vpop.permute.xlu0 %1778
        %1782 = vset.pattern.permute.xlu0 0
        %1783 = vperm.xlu0 %1782, %v1717
        %v1784 = vpop.permute.xlu0 %1783
        %1787 = vset.pattern.permute.xlu0 0
        %1788 = vperm.xlu0 %1787, %v1718
        %v1789 = vpop.permute.xlu0 %1788
        %1792 = vset.pattern.permute.xlu0 0
        %1793 = vperm.xlu0 %1792, %v1719
        %v1794 = vpop.permute.xlu0 %1793
        %1797 = vset.pattern.permute.xlu0 0
        %1798 = vperm.xlu0 %1797, %v1720
        %v1799 = vpop.permute.xlu0 %1798
        %v1801 = vadd.f32 %v1657, %v1724
        %v1802 = vadd.f32 %v1660, %v1729
        %v1803 = vadd.f32 %v1663, %v1734
        %v1804 = vadd.f32 %v1666, %v1739
        %v1805 = vadd.f32 %v1669, %v1744
        %v1806 = vadd.f32 %v1672, %v1749
        %v1807 = vadd.f32 %v1675, %v1754
        %v1808 = vadd.f32 %v1678, %v1759
        %v1809 = vadd.f32 %v1681, %v1764
        %v1810 = vadd.f32 %v1684, %v1769
        %v1811 = vadd.f32 %v1687, %v1774
        %v1812 = vadd.f32 %v1690, %v1779
        %v1813 = vadd.f32 %v1693, %v1784
        %v1814 = vadd.f32 %v1696, %v1789
        %v1815 = vadd.f32 %v1699, %v1794
        %v1816 = vadd.f32 %v1702, %v1799
        %v1817 = vpack.c.bf16 %v1801, %v1801
        %v1818 = vpack.c.bf16 %v1802, %v1802
        %v1819 = vpack.c.bf16 %v1803, %v1803
        %v1820 = vpack.c.bf16 %v1804, %v1804
        %v1821 = vpack.c.bf16 %v1805, %v1805
        %v1822 = vpack.c.bf16 %v1806, %v1806
        %v1823 = vpack.c.bf16 %v1807, %v1807
        %v1824 = vpack.c.bf16 %v1808, %v1808
        %v1825 = vpack.c.bf16 %v1809, %v1809
        %v1826 = vpack.c.bf16 %v1810, %v1810
        %v1827 = vpack.c.bf16 %v1811, %v1811
        %v1828 = vpack.c.bf16 %v1812, %v1812
        %v1829 = vpack.c.bf16 %v1813, %v1813
        %v1830 = vpack.c.bf16 %v1814, %v1814
        %v1831 = vpack.c.bf16 %v1815, %v1815
        %v1832 = vpack.c.bf16 %v1816, %v1816
        %v1833 = vunpack.c.l.bf16 %v1817
        %v1834 = vunpack.c.l.bf16 %v1818
        %v1835 = vunpack.c.l.bf16 %v1819
        %v1836 = vunpack.c.l.bf16 %v1820
        %v1837 = vmul.f32 %v1833, 0.5
        %v1838 = vmul.f32 %v1834, 0.5
        %v1839 = vmul.f32 %v1835, 0.5
        %v1840 = vmul.f32 %v1836, 0.5
        %v1841 = vpack.c.bf16 %v1837, %v1837
        %v1842 = vpack.c.bf16 %v1838, %v1838
        %v1843 = vpack.c.bf16 %v1839, %v1839
        %v1844 = vpack.c.bf16 %v1840, %v1840
        %v1845 = vunpack.c.l.bf16 %v1841
        %v1846 = vunpack.c.l.bf16 %v1842
        %v1847 = vunpack.c.l.bf16 %v1843
        %v1848 = vunpack.c.l.bf16 %v1844
        %v1849 = vtanh.pop %v1845
        %v1850 = vtanh.pop %v1846
        %v1851 = vtanh.pop %v1847
        %v1852 = vtanh.pop %v1848
        %v1853 = vpack.c.bf16 %v1849, %v1849
        %v1854 = vpack.c.bf16 %v1850, %v1850
        %v1855 = vpack.c.bf16 %v1851, %v1851
        %v1856 = vpack.c.bf16 %v1852, %v1852
        %v1857 = vunpack.c.l.bf16 %v1853
        %v1858 = vunpack.c.l.bf16 %v1854
        %v1859 = vunpack.c.l.bf16 %v1855
        %v1860 = vunpack.c.l.bf16 %v1856
        %v1861 = vmul.f32 %v1857, 0.5
        %v1862 = vmul.f32 %v1858, 0.5
        %v1863 = vmul.f32 %v1859, 0.5
        %v1864 = vmul.f32 %v1860, 0.5
        %v1865 = vpack.c.bf16 %v1861, %v1861
        %v1866 = vpack.c.bf16 %v1862, %v1862
        %v1867 = vpack.c.bf16 %v1863, %v1863
        %v1868 = vpack.c.bf16 %v1864, %v1864
        %v1869 = vunpack.c.l.bf16 %v1865
        %v1870 = vunpack.c.l.bf16 %v1866
        %v1871 = vunpack.c.l.bf16 %v1867
        %v1872 = vunpack.c.l.bf16 %v1868
        %v1873 = vadd.f32 %v1869, 0.5
        %v1874 = vadd.f32 %v1870, 0.5
        %v1875 = vadd.f32 %v1871, 0.5
        %v1876 = vadd.f32 %v1872, 0.5
        %v1877 = vpack.c.bf16 %v1873, %v1873
        %v1878 = vpack.c.bf16 %v1874, %v1874
        %v1879 = vpack.c.bf16 %v1875, %v1875
        %v1880 = vpack.c.bf16 %v1876, %v1876
        %v1881 = vunpack.c.l.bf16 %v1821
        %v1882 = vunpack.c.l.bf16 %v1822
        %v1883 = vunpack.c.l.bf16 %v1823
        %v1884 = vunpack.c.l.bf16 %v1824
        %v1885 = vmul.f32 %v1881, 0.5
        %v1886 = vmul.f32 %v1882, 0.5
        %v1887 = vmul.f32 %v1883, 0.5
        %v1888 = vmul.f32 %v1884, 0.5
        %v1889 = vpack.c.bf16 %v1885, %v1885
        %v1890 = vpack.c.bf16 %v1886, %v1886
        %v1891 = vpack.c.bf16 %v1887, %v1887
        %v1892 = vpack.c.bf16 %v1888, %v1888
        %v1893 = vunpack.c.l.bf16 %v1889
        %v1894 = vunpack.c.l.bf16 %v1890
        %v1895 = vunpack.c.l.bf16 %v1891
        %v1896 = vunpack.c.l.bf16 %v1892
        %v1897 = vtanh.pop %v1893
        %v1898 = vtanh.pop %v1894
        %v1899 = vtanh.pop %v1895
        %v1900 = vtanh.pop %v1896
        %v1901 = vpack.c.bf16 %v1897, %v1897
        %v1902 = vpack.c.bf16 %v1898, %v1898
        %v1903 = vpack.c.bf16 %v1899, %v1899
        %v1904 = vpack.c.bf16 %v1900, %v1900
        %v1905 = vunpack.c.l.bf16 %v1901
        %v1906 = vunpack.c.l.bf16 %v1902
        %v1907 = vunpack.c.l.bf16 %v1903
        %v1908 = vunpack.c.l.bf16 %v1904
        %v1909 = vmul.f32 %v1905, 0.5
        %v1910 = vmul.f32 %v1906, 0.5
        %v1911 = vmul.f32 %v1907, 0.5
        %v1912 = vmul.f32 %v1908, 0.5
        %v1913 = vpack.c.bf16 %v1909, %v1909
        %v1914 = vpack.c.bf16 %v1910, %v1910
        %v1915 = vpack.c.bf16 %v1911, %v1911
        %v1916 = vpack.c.bf16 %v1912, %v1912
        %v1917 = vunpack.c.l.bf16 %v1913
        %v1918 = vunpack.c.l.bf16 %v1914
        %v1919 = vunpack.c.l.bf16 %v1915
        %v1920 = vunpack.c.l.bf16 %v1916
        %v1921 = vadd.f32 %v1917, 0.5
        %v1922 = vadd.f32 %v1918, 0.5
        %v1923 = vadd.f32 %v1919, 0.5
        %v1924 = vadd.f32 %v1920, 0.5
        %v1925 = vpack.c.bf16 %v1921, %v1921
        %v1926 = vpack.c.bf16 %v1922, %v1922
        %v1927 = vpack.c.bf16 %v1923, %v1923
        %v1928 = vpack.c.bf16 %v1924, %v1924
        %v1929 = vunpack.c.l.bf16 %v1825
        %v1930 = vunpack.c.l.bf16 %v1826
        %v1931 = vunpack.c.l.bf16 %v1827
        %v1932 = vunpack.c.l.bf16 %v1828
        %v1933 = vtanh.pop %v1929
        %v1934 = vtanh.pop %v1930
        %v1935 = vtanh.pop %v1931
        %v1936 = vtanh.pop %v1932
        %v1937 = vpack.c.bf16 %v1933, %v1933
        %v1938 = vpack.c.bf16 %v1934, %v1934
        %v1939 = vpack.c.bf16 %v1935, %v1935
        %v1940 = vpack.c.bf16 %v1936, %v1936
        %v1941 = vunpack.c.l.bf16 %v1829
        %v1942 = vunpack.c.l.bf16 %v1830
        %v1943 = vunpack.c.l.bf16 %v1831
        %v1944 = vunpack.c.l.bf16 %v1832
        %v1945 = vmul.f32 %v1941, 0.5
        %v1946 = vmul.f32 %v1942, 0.5
        %v1947 = vmul.f32 %v1943, 0.5
        %v1948 = vmul.f32 %v1944, 0.5
        %v1949 = vpack.c.bf16 %v1945, %v1945
        %v1950 = vpack.c.bf16 %v1946, %v1946
        %v1951 = vpack.c.bf16 %v1947, %v1947
        %v1952 = vpack.c.bf16 %v1948, %v1948
        %v1953 = vunpack.c.l.bf16 %v1949
        %v1954 = vunpack.c.l.bf16 %v1950
        %v1955 = vunpack.c.l.bf16 %v1951
        %v1956 = vunpack.c.l.bf16 %v1952
        %v1957 = vtanh.pop %v1953
        %v1958 = vtanh.pop %v1954
        %v1959 = vtanh.pop %v1955
        %v1960 = vtanh.pop %v1956
        %v1961 = vpack.c.bf16 %v1957, %v1957
        %v1962 = vpack.c.bf16 %v1958, %v1958
        %v1963 = vpack.c.bf16 %v1959, %v1959
        %v1964 = vpack.c.bf16 %v1960, %v1960
        %v1965 = vunpack.c.l.bf16 %v1961
        %v1966 = vunpack.c.l.bf16 %v1962
        %v1967 = vunpack.c.l.bf16 %v1963
        %v1968 = vunpack.c.l.bf16 %v1964
        %v1969 = vmul.f32 %v1965, 0.5
        %v1970 = vmul.f32 %v1966, 0.5
        %v1971 = vmul.f32 %v1967, 0.5
        %v1972 = vmul.f32 %v1968, 0.5
        %v1973 = vpack.c.bf16 %v1969, %v1969
        %v1974 = vpack.c.bf16 %v1970, %v1970
        %v1975 = vpack.c.bf16 %v1971, %v1971
        %v1976 = vpack.c.bf16 %v1972, %v1972
        %v1977 = vunpack.c.l.bf16 %v1973
        %v1978 = vunpack.c.l.bf16 %v1974
        %v1979 = vunpack.c.l.bf16 %v1975
        %v1980 = vunpack.c.l.bf16 %v1976
        %v1981 = vadd.f32 %v1977, 0.5
        %v1982 = vadd.f32 %v1978, 0.5
        %v1983 = vadd.f32 %v1979, 0.5
        %v1984 = vadd.f32 %v1980, 0.5
        %v1985 = vpack.c.bf16 %v1981, %v1981
        %v1986 = vpack.c.bf16 %v1982, %v1982
        %v1987 = vpack.c.bf16 %v1983, %v1983
        %v1988 = vpack.c.bf16 %v1984, %v1984
        %v1989 = vunpack.c.l.bf16 %v1925
        %v1990 = vunpack.c.l.bf16 %v1926
        %v1991 = vunpack.c.l.bf16 %v1927
        %v1992 = vunpack.c.l.bf16 %v1928
        %v1993 = vmul.f32 %v1989, %v1440
        %v1994 = vmul.f32 %v1990, %v1441
        %v1995 = vmul.f32 %v1991, %v1442
        %v1996 = vmul.f32 %v1992, %v1443
        %v1997 = vunpack.c.l.bf16 %v1877
        %v1998 = vunpack.c.l.bf16 %v1878
        %v1999 = vunpack.c.l.bf16 %v1879
        %v2000 = vunpack.c.l.bf16 %v1880
        %v2001 = vunpack.c.l.bf16 %v1937
        %v2002 = vunpack.c.l.bf16 %v1938
        %v2003 = vunpack.c.l.bf16 %v1939
        %v2004 = vunpack.c.l.bf16 %v1940
        %v2005 = vmul.f32 %v1997, %v2001
        %v2006 = vmul.f32 %v1998, %v2002
        %v2007 = vmul.f32 %v1999, %v2003
        %v2008 = vmul.f32 %v2000, %v2004
        %v2009 = vadd.f32 %v1993, %v2005
        %v2010 = vadd.f32 %v1994, %v2006
        %v2011 = vadd.f32 %v1995, %v2007
        %v2012 = vadd.f32 %v1996, %v2008
        %v2013 = vunpack.c.l.bf16 %v1985
        %v2014 = vunpack.c.l.bf16 %v1986
        %v2015 = vunpack.c.l.bf16 %v1987
        %v2016 = vunpack.c.l.bf16 %v1988
        %v2017 = vpack.c.bf16 %v2009, %v2009
        %v2018 = vpack.c.bf16 %v2010, %v2010
        %v2019 = vpack.c.bf16 %v2011, %v2011
        %v2020 = vpack.c.bf16 %v2012, %v2012
        %v2021 = vunpack.c.l.bf16 %v2017
        %v2022 = vunpack.c.l.bf16 %v2018
        %v2023 = vunpack.c.l.bf16 %v2019
        %v2024 = vunpack.c.l.bf16 %v2020
        %v2025 = vtanh.pop %v2021
        %v2026 = vtanh.pop %v2022
        %v2027 = vtanh.pop %v2023
        %v2028 = vtanh.pop %v2024
        %v2029 = vpack.c.bf16 %v2025, %v2025
        %v2030 = vpack.c.bf16 %v2026, %v2026
        %v2031 = vpack.c.bf16 %v2027, %v2027
        %v2032 = vpack.c.bf16 %v2028, %v2028
        %v2033 = vunpack.c.l.bf16 %v2029
        %v2034 = vunpack.c.l.bf16 %v2030
        %v2035 = vunpack.c.l.bf16 %v2031
        %v2036 = vunpack.c.l.bf16 %v2032
        %v2037 = vmul.f32 %v2013, %v2033
        %v2038 = vmul.f32 %v2014, %v2034
        %v2039 = vmul.f32 %v2015, %v2035
        %v2040 = vmul.f32 %v2016, %v2036
        %v2041 = vpack.c.bf16 %v2037, %v2037
        %v2042 = vpack.c.bf16 %v2038, %v2038
        %v2043 = vpack.c.bf16 %v2039, %v2039
        %v2044 = vpack.c.bf16 %v2040, %v2040
        %2045 = vst [vmem:[%s573 + $0x10] sm:$0xf] %v2041
        %2046 = vst [vmem:[%s573 + $0x14] sm:$0xf] %v2042
        %2047 = vst [vmem:[%s573 + $0x18] sm:$0xf] %v2043
        %2048 = vst [vmem:[%s573 + $0x1c] sm:$0xf] %v2044
        %2049 = vst [vmem:[%s573 + $0x30] sm:$0xf] %v2017
        %2050 = vst [vmem:[%s573 + $0x34] sm:$0xf] %v2018
        %2051 = vst [vmem:[%s573 + $0x38] sm:$0xf] %v2019
        %2052 = vst [vmem:[%s573 + $0x3c] sm:$0xf] %v2020
        %2054 = vset.pattern.permute.xlu0 0
        %2055 = vperm.xlu0 %2054, %v695
        %v2056 = vpop.permute.xlu0 %2055
        %2059 = vset.pattern.permute.xlu0 0
        %2060 = vperm.xlu0 %2059, %v696
        %v2061 = vpop.permute.xlu0 %2060
        %2064 = vset.pattern.permute.xlu0 0
        %2065 = vperm.xlu0 %2064, %v697
        %v2066 = vpop.permute.xlu0 %2065
        %2069 = vset.pattern.permute.xlu0 0
        %2070 = vperm.xlu0 %2069, %v698
        %v2071 = vpop.permute.xlu0 %2070
        %v2073 = vmul.f32 %v2037, %v2056
        %v2074 = vmul.f32 %v2038, %v2061
        %v2075 = vmul.f32 %v2039, %v2066
        %v2076 = vmul.f32 %v2040, %v2071
        %v2077 = vadd.f32 %v2073, %v2074
        %v2078 = vadd.f32 %v2077, %v2075
        %v2079 = vadd.f32 %v2078, %v2076
        %v2080 = vrot.slane %v2079, 4
        %v2081 = vadd.f32 %v2079, %v2080
        %v2082 = vrot.slane %v2081, 2
        %v2083 = vadd.f32 %v2081, %v2082
        %v2084 = vrot.slane %v2083, 1
        %v2085 = vadd.f32 %v2083, %v2084
        %v2086 = vstv %s599
        %v2087 = vadd.f32 %v2085, %v2086
        %v2088 = vtanh.pop %v2087
        %v2089 = vsub.f32 0.0, %v2088
        %v2090 = vstv %s598
        %v2091 = vmul.f32 %v2089, %v2090
        %2092 = vst [vmem:[%s585] sm:$0x1] %v2091
        %2093 = vst [vmem:[%s588] sm:$0x1] %v607
        %2094 = vst [vmem:[%s591] sm:$0x1] %v615
        %p2095 = scmp.lt.s32.totalorder %s25, 1
        %s2096 = scalar_select %p2095, %s25, 1
        %s2097 = scalar_lea.vmem %s9, %s2096
        %p2098 = scmp.lt.s32.totalorder %s25, 1
        %s2099 = scalar_select %p2098, %s25, 1
        %s2100 = scalar_lea.vmem %s10, %s2099
        %p2101 = scmp.lt.s32.totalorder %s25, 1
        %s2102 = scalar_select %p2101, %s25, 1
        %s2103 = scalar_lea.vmem %s11, %s2102
        %s2104 = sand.u32 %s320, 1
        %s2105 = sand.u32 %s320, 1
        %s2106 = smul.addr %s2105, 64
        %s2107 = scalar_lea.vmem [#allocation5], %s2106
        // Predicated region
        $region102: #{rnnprop_step.1} parent=92 // pred_check
          %p2108 = pneg %p252
        $region103: #{rnnprop_step.1} parent=92 // pred_check_branch
          %2110 = sbr.rel (%p2108) target = $region105
        $region104: #{rnnprop_step.1} parent=92 // pred_region
          _
        $region105: #{rnnprop_step.1} parent=92 // pred_fallthru
          _
        // Predicated region
        $region106: #{rnnprop_step.1} parent=92 // pred_check
          %p2111 = pneg %p278
        $region107: #{rnnprop_step.1} parent=92 // pred_check_branch
          %2113 = sbr.rel (%p2111) target = $region109
        $region108: #{rnnprop_step.1} parent=92 // pred_region
          _
        $region109: #{rnnprop_step.1} parent=92 // pred_fallthru
          _
        // Predicated region
        $region110: #{rnnprop_step.1} parent=92 // pred_check
          %p2114 = pneg %p304
        $region111: #{rnnprop_step.1} parent=92 // pred_check_branch
          %2116 = sbr.rel (%p2114) target = $region113
        $region112: #{rnnprop_step.1} parent=92 // pred_region
          _
        $region113: #{rnnprop_step.1} parent=92 // pred_fallthru
          _
        // Predicated region
        $region114: #{rnnprop_step.1} parent=92 // pred_check
          %p2117 = pneg %p330
        $region115: #{rnnprop_step.1} parent=92 // pred_check_branch
          %2119 = sbr.rel (%p2117) target = $region117
        $region116: #{rnnprop_step.1} parent=92 // pred_region
          %s2120 = smul.addr %s25, 4
          %s2121 = scalar_lea.vmem %s12, %s2120
          // Predicated region
          $region118: #{rnnprop_step.1} parent=116 // pred_check
            _
          $region119: #{rnnprop_step.1} parent=116 // pred_check_branch
            %2123 = sbr.rel (0) target = $region121
          $region120: #{rnnprop_step.1} parent=116 // pred_region
            // Predicated region
            $region122: #{rnnprop_step.1} parent=120 // pred_check
              _
            $region123: #{rnnprop_step.1} parent=120 // pred_check_branch
              %2125 = sbr.rel target = $region125
            $region124: #{rnnprop_step.1} parent=120 // pred_region
              // Predicated region
              $region137: #{rnnprop_step.1} parent=124 // pred_check
                _
              $region138: #{rnnprop_step.1} parent=124 // pred_check_branch
                %2171 = sbr.rel (0) target = $region140
              $region139: #{rnnprop_step.1} parent=124 // pred_region
                loop: start=0, step=1, limit=1
                $region141: #{rnnprop_step.1} parent=139 // loop_pre_header
                  _
                $region142: #{rnnprop_step.1} parent=139 // loop_header
                  %s2173 = sphi 0, %s2177
                  %p2174 = scmp.ge.s32.totalorder %s2173, 1
                  %s2178 = sphi %s2107, %s2107
                  %s2179 = sphi %s2121, %s2121
                $region143: #{rnnprop_step.1} parent=139 // loop_header_branch
                  %2176 = sbr.rel (%p2174) target = $region147
                $region144: #{rnnprop_step.1} parent=139 // loop_body
                  _
                $region145: #{rnnprop_step.1} parent=139 // loop_footer
                  %s2177 = sadd.s32 1, %s2173
                $region146: #{rnnprop_step.1} parent=139 // loop_footer_branch
                  %2172 = sbr.rel target = $region142
                $region147: #{rnnprop_step.1} parent=139 // loop_exit
                  _
                %s2181 = ssub.s32 16, 1
                loop: start=0, step=1, limit=1
                $region148: #{rnnprop_step.1} parent=139 // loop_pre_header
                  _
                $region149: #{rnnprop_step.1} parent=139 // loop_header
                  %s2183 = sphi 0, %s2187
                  %p2184 = scmp.ge.s32.totalorder %s2183, 1
                  %s2188 = sphi %s2107, %s2107
                  %s2189 = sphi %s2121, %s2121
                $region150: #{rnnprop_step.1} parent=139 // loop_header_branch
                  %2186 = sbr.rel (%p2184) target = $region154
                $region151: #{rnnprop_step.1} parent=139 // loop_body
                  %v2190 = vld [vmem:[%s2188] sm:%s2181]
                  %2191 = vst [vmem:[%s2189] sm:%s2181] %v2190
                  %v2192 = vld [vmem:[%s2188 + $0x4] sm:%s2181]
                  %2193 = vst [vmem:[%s2189 + $0x8] sm:%s2181] %v2192
                  %v2194 = vld [vmem:[%s2188 + $0x8] sm:%s2181]
                  %2195 = vst [vmem:[%s2189 + $0x10] sm:%s2181] %v2194
                  %v2196 = vld [vmem:[%s2188 + $0xc] sm:%s2181]
                  %2197 = vst [vmem:[%s2189 + $0x18] sm:%s2181] %v2196
                  %v2198 = vld [vmem:[%s2188 + $0x10] sm:%s2181]
                  %2199 = vst [vmem:[%s2189 + $0x20] sm:%s2181] %v2198
                  %v2200 = vld [vmem:[%s2188 + $0x14] sm:%s2181]
                  %2201 = vst [vmem:[%s2189 + $0x28] sm:%s2181] %v2200
                  %v2202 = vld [vmem:[%s2188 + $0x18] sm:%s2181]
                  %2203 = vst [vmem:[%s2189 + $0x30] sm:%s2181] %v2202
                  %v2204 = vld [vmem:[%s2188 + $0x1c] sm:%s2181]
                  %2205 = vst [vmem:[%s2189 + $0x38] sm:%s2181] %v2204
                  %v2206 = vld [vmem:[%s2188 + $0x20] sm:%s2181]
                  %2207 = vst [vmem:[%s2189 + $0x40] sm:%s2181] %v2206
                  %v2208 = vld [vmem:[%s2188 + $0x24] sm:%s2181]
                  %2209 = vst [vmem:[%s2189 + $0x48] sm:%s2181] %v2208
                  %v2210 = vld [vmem:[%s2188 + $0x28] sm:%s2181]
                  %2211 = vst [vmem:[%s2189 + $0x50] sm:%s2181] %v2210
                  %v2212 = vld [vmem:[%s2188 + $0x2c] sm:%s2181]
                  %2213 = vst [vmem:[%s2189 + $0x58] sm:%s2181] %v2212
                  %v2214 = vld [vmem:[%s2188 + $0x30] sm:%s2181]
                  %2215 = vst [vmem:[%s2189 + $0x60] sm:%s2181] %v2214
                  %v2216 = vld [vmem:[%s2188 + $0x34] sm:%s2181]
                  %2217 = vst [vmem:[%s2189 + $0x68] sm:%s2181] %v2216
                  %v2218 = vld [vmem:[%s2188 + $0x38] sm:%s2181]
                  %2219 = vst [vmem:[%s2189 + $0x70] sm:%s2181] %v2218
                  %v2220 = vld [vmem:[%s2188 + $0x3c] sm:%s2181]
                  %2221 = vst [vmem:[%s2189 + $0x78] sm:%s2181] %v2220
                $region152: #{rnnprop_step.1} parent=139 // loop_footer
                  %s2187 = sadd.s32 1, %s2183
                $region153: #{rnnprop_step.1} parent=139 // loop_footer_branch
                  %2182 = sbr.rel target = $region149
                $region154: #{rnnprop_step.1} parent=139 // loop_exit
                  _
              $region140: #{rnnprop_step.1} parent=124 // pred_fallthru
                _
            $region125: #{rnnprop_step.1} parent=120 // pred_fallthru
              _
            // Predicated region
            $region126: #{rnnprop_step.1} parent=120 // pred_check
              _
            $region127: #{rnnprop_step.1} parent=120 // pred_check_branch
              %2127 = sbr.rel (0) target = $region129
            $region128: #{rnnprop_step.1} parent=120 // pred_region
              %s2129 = ssub.s32 16, 1
              loop: start=0, step=1, limit=1
              $region130: #{rnnprop_step.1} parent=128 // loop_pre_header
                _
              $region131: #{rnnprop_step.1} parent=128 // loop_header
                %s2131 = sphi 0, %s2135
                %p2132 = scmp.ge.s32.totalorder %s2131, 1
                %s2136 = sphi %s2107, %s2107
                %s2137 = sphi %s2121, %s2121
              $region132: #{rnnprop_step.1} parent=128 // loop_header_branch
                %2134 = sbr.rel (%p2132) target = $region136
              $region133: #{rnnprop_step.1} parent=128 // loop_body
                %v2138 = vld [vmem:[%s2136] sm:%s2129]
                %2139 = vst [vmem:[%s2137] sm:%s2129] %v2138
                %v2140 = vld [vmem:[%s2136 + $0x4] sm:%s2129]
                %2141 = vst [vmem:[%s2137 + $0x8] sm:%s2129] %v2140
                %v2142 = vld [vmem:[%s2136 + $0x8] sm:%s2129]
                %2143 = vst [vmem:[%s2137 + $0x10] sm:%s2129] %v2142
                %v2144 = vld [vmem:[%s2136 + $0xc] sm:%s2129]
                %2145 = vst [vmem:[%s2137 + $0x18] sm:%s2129] %v2144
                %v2146 = vld [vmem:[%s2136 + $0x10] sm:%s2129]
                %2147 = vst [vmem:[%s2137 + $0x20] sm:%s2129] %v2146
                %v2148 = vld [vmem:[%s2136 + $0x14] sm:%s2129]
                %2149 = vst [vmem:[%s2137 + $0x28] sm:%s2129] %v2148
                %v2150 = vld [vmem:[%s2136 + $0x18] sm:%s2129]
                %2151 = vst [vmem:[%s2137 + $0x30] sm:%s2129] %v2150
                %v2152 = vld [vmem:[%s2136 + $0x1c] sm:%s2129]
                %2153 = vst [vmem:[%s2137 + $0x38] sm:%s2129] %v2152
                %v2154 = vld [vmem:[%s2136 + $0x20] sm:%s2129]
                %2155 = vst [vmem:[%s2137 + $0x40] sm:%s2129] %v2154
                %v2156 = vld [vmem:[%s2136 + $0x24] sm:%s2129]
                %2157 = vst [vmem:[%s2137 + $0x48] sm:%s2129] %v2156
                %v2158 = vld [vmem:[%s2136 + $0x28] sm:%s2129]
                %2159 = vst [vmem:[%s2137 + $0x50] sm:%s2129] %v2158
                %v2160 = vld [vmem:[%s2136 + $0x2c] sm:%s2129]
                %2161 = vst [vmem:[%s2137 + $0x58] sm:%s2129] %v2160
                %v2162 = vld [vmem:[%s2136 + $0x30] sm:%s2129]
                %2163 = vst [vmem:[%s2137 + $0x60] sm:%s2129] %v2162
                %v2164 = vld [vmem:[%s2136 + $0x34] sm:%s2129]
                %2165 = vst [vmem:[%s2137 + $0x68] sm:%s2129] %v2164
                %v2166 = vld [vmem:[%s2136 + $0x38] sm:%s2129]
                %2167 = vst [vmem:[%s2137 + $0x70] sm:%s2129] %v2166
                %v2168 = vld [vmem:[%s2136 + $0x3c] sm:%s2129]
                %2169 = vst [vmem:[%s2137 + $0x78] sm:%s2129] %v2168
              $region134: #{rnnprop_step.1} parent=128 // loop_footer
                %s2135 = sadd.s32 1, %s2131
              $region135: #{rnnprop_step.1} parent=128 // loop_footer_branch
                %2130 = sbr.rel target = $region131
              $region136: #{rnnprop_step.1} parent=128 // loop_exit
                _
            $region129: #{rnnprop_step.1} parent=120 // pred_fallthru
              _
          $region121: #{rnnprop_step.1} parent=116 // pred_fallthru
            _
          %2222 = vnop
        $region117: #{rnnprop_step.1} parent=92 // pred_fallthru
          _
      $region93: #{rnnprop_step.1} parent=5 // pred_fallthru
        _
      %p2223 = scmp.le.s32.totalorder 2, %s20
      // Predicated region
      $region155: #{rnnprop_step.1} parent=5 // pred_check
        %p2224 = pneg %p2223
      $region156: #{rnnprop_step.1} parent=5 // pred_check_branch
        %2226 = sbr.rel (%p2224) target = $region158
      $region157: #{rnnprop_step.1} parent=5 // pred_region
        %s2227 = ssub.s32 %s20, 2
        // Predicated region
        $region159: #{rnnprop_step.1} parent=157 // pred_check
          %p2228 = pneg %p258
        $region160: #{rnnprop_step.1} parent=157 // pred_check_branch
          %2230 = sbr.rel (%p2228) target = $region162
        $region161: #{rnnprop_step.1} parent=157 // pred_region
          %p2231 = scmp.lt.s32.totalorder %s26, 1
          %s2232 = scalar_select %p2231, %s26, 1
          %s2233 = scalar_lea.vmem %s9, %s2232
        $region162: #{rnnprop_step.1} parent=157 // pred_fallthru
          _
        // Predicated region
        $region163: #{rnnprop_step.1} parent=157 // pred_check
          %p2234 = pneg %p284
        $region164: #{rnnprop_step.1} parent=157 // pred_check_branch
          %2236 = sbr.rel (%p2234) target = $region166
        $region165: #{rnnprop_step.1} parent=157 // pred_region
          %p2237 = scmp.lt.s32.totalorder %s26, 1
          %s2238 = scalar_select %p2237, %s26, 1
          %s2239 = scalar_lea.vmem %s10, %s2238
        $region166: #{rnnprop_step.1} parent=157 // pred_fallthru
          _
        // Predicated region
        $region167: #{rnnprop_step.1} parent=157 // pred_check
          %p2240 = pneg %p310
        $region168: #{rnnprop_step.1} parent=157 // pred_check_branch
          %2242 = sbr.rel (%p2240) target = $region170
        $region169: #{rnnprop_step.1} parent=157 // pred_region
          %p2243 = scmp.lt.s32.totalorder %s26, 1
          %s2244 = scalar_select %p2243, %s26, 1
          %s2245 = scalar_lea.vmem %s11, %s2244
        $region170: #{rnnprop_step.1} parent=157 // pred_fallthru
          _
        // Predicated region
        $region171: #{rnnprop_step.1} parent=157 // pred_check
          %p2246 = pneg %p336
        $region172: #{rnnprop_step.1} parent=157 // pred_check_branch
          %2248 = sbr.rel (%p2246) target = $region174
        $region173: #{rnnprop_step.1} parent=157 // pred_region
          %s2249 = sand.u32 %s321, 1
          %s2250 = sand.u32 %s321, 1
          %s2251 = smul.addr %s2250, 64
          %s2252 = scalar_lea.vmem [#allocation5], %s2251
        $region174: #{rnnprop_step.1} parent=157 // pred_fallthru
          _
      $region158: #{rnnprop_step.1} parent=5 // pred_fallthru
        _
    $region6: #{rnnprop_step.1} parent=1 // loop_footer
      %s24 = sadd.s32 1, %s20
    $region7: #{rnnprop_step.1} parent=1 // loop_footer_branch
      %19 = sbr.rel target = $region3
    $region8: #{rnnprop_step.1} parent=1 // loop_exit
      _
    %2253 = vsyncpa [#allocation3], 1
    %s2254 = scalar_lea.sflag [#allocation3], 1
    %2255 = vsyncpa %s2254, 1

</llo_original>
